<compile_context>
chip_gen: v5e
topology: v5e:2x2
jax: 0.10.0
libtpu: 0.0.40
codegen_flags: <defaults>
</compile_context>

<pallas_src>
import functools

import jax
import jax.numpy as jnp
from jax.experimental import pallas as pl
from jax.experimental.pallas import tpu as pltpu


def _round_up(x, m):
    return ((x + m - 1) // m) * m


def _conv_taps_kernel(x_ref, xh_ref, w_ref, b_ref, o_ref, *, taps, negative_slope):
    """One output tile: out[C_out, TL] = sum_s w[s] @ xwin[:, s:s+TL] + b (+ LeakyReLU)."""
    tl = o_ref.shape[-1]
    # Main tile plus its 128-wide halo block -> window of TL + 128 lane-aligned columns.
    xwin = jnp.concatenate([x_ref[...], xh_ref[...]], axis=-1)        # (C2, TL + 128) bf16
    acc = jnp.zeros(o_ref.shape, jnp.float32)                         # (C_out, TL) f32
    for s in range(taps):                                             # static unroll, taps <= 9
        acc = acc + jnp.dot(w_ref[s], xwin[:, s:s + tl],
                            preferred_element_type=jnp.float32)
    acc = acc + b_ref[...]                                            # (C_out, 1) broadcast
    if negative_slope is not None:
        acc = jnp.where(acc >= 0.0, acc, acc * negative_slope)
    o_ref[...] = acc.astype(o_ref.dtype)


def conv1d_pallas(x, w, b, *, stride, padding, negative_slope=None,
                  out_dtype=jnp.bfloat16, tl_max=512):
    """PyTorch-semantics Conv1d on [B, C, L] (+ optional fused LeakyReLU)."""
    B, C_in, L = x.shape
    C_out, _, K = w.shape
    L_out = (L + 2 * padding - K) // stride + 1

    # Zero-pad taps so K is a multiple of stride (zero taps are exact no-ops).
    K_pad = _round_up(K, stride)
    if K_pad != K:
        w = jnp.pad(w, ((0, 0), (0, 0), (0, K_pad - K)))
    S = K_pad // stride
    assert S - 1 <= 128, "tap halo exceeds the 128-wide halo block"

    # Spatial zero-padding (same semantics as torch Conv1d padding).
    x_p = jnp.pad(x, ((0, 0), (0, 0), (padding, padding)))
    L_p = L + 2 * padding

    # Phase-decompose a strided conv into a stride-1 conv: channel (r, c) -> r*C_in + c.
    if stride > 1:
        L_ps = _round_up(L_p, stride)
        if L_ps != L_p:
            x_p = jnp.pad(x_p, ((0, 0), (0, 0), (0, L_ps - L_p)))
        x_p = x_p.reshape(B, C_in, L_ps // stride, stride)
        x_p = jnp.transpose(x_p, (0, 3, 1, 2)).reshape(B, stride * C_in, L_ps // stride)
        w = w.reshape(C_out, C_in, S, stride)
        w = jnp.transpose(w, (0, 3, 1, 2)).reshape(C_out, stride * C_in, S)
    C2, L2 = x_p.shape[1], x_p.shape[2]

    # Lane-dense output tiling: TL is a multiple of 128 (128 <= TL <= tl_max).
    TL = min(tl_max, _round_up(L_out, 128))
    L_out_pad = _round_up(L_out, TL)
    n_tiles = L_out_pad // TL

    # Input must cover every (main TL + 128-wide halo) window; pad/trim with zeros.
    L2_need = L_out_pad + 128
    if L2 < L2_need:
        x_p = jnp.pad(x_p, ((0, 0), (0, 0), (0, L2_need - L2)))
    elif L2 > L2_need:
        x_p = x_p[:, :, :L2_need]

    x_bf = x_p.astype(jnp.bfloat16)                              # bf16 MXU operand
    w_t = jnp.transpose(w, (2, 0, 1)).astype(jnp.bfloat16)       # [S, C_out, C2], tap-major
    b2 = b.reshape(C_out, 1).astype(jnp.float32)                 # f32 epilogue

    halo_step = TL // 128
    kernel = functools.partial(_conv_taps_kernel, taps=S, negative_slope=negative_slope)

    out = pl.pallas_call(
        kernel,
        out_shape=jax.ShapeDtypeStruct((B, C_out, L_out_pad), out_dtype),
        grid=(B, n_tiles),
        in_specs=[
            # main input tile: [C2, TL] with L in lanes
            pl.BlockSpec((None, C2, TL), lambda bi, j: (bi, 0, j)),
            # 128-wide halo block immediately after the main tile
            pl.BlockSpec((None, C2, 128), lambda bi, j: (bi, 0, (j + 1) * halo_step)),
            # resident tap-major weights and bias (constant block index -> fetched once)
            pl.BlockSpec((S, C_out, C2), lambda bi, j: (0, 0, 0)),
            pl.BlockSpec((C_out, 1), lambda bi, j: (0, 0)),
        ],
        out_specs=pl.BlockSpec((None, C_out, TL), lambda bi, j: (bi, 0, j)),
        compiler_params=pltpu.CompilerParams(
            dimension_semantics=("parallel", "parallel"),
            vmem_limit_bytes=48 * 1024 * 1024,
        ),
    )(x_bf, x_bf, w_t, b2)

    return out[:, :, :L_out]


def init_discriminator_params(key, in_ch, num_chs):
    """Deterministic params mirroring ModuleDiscriminator.__init__ shapes."""
    kernel_size = 24
    stride = 4
    padding = (kernel_size - stride) // 2

    def make(k, c_out, c_in, ks):
        kw, kb = jax.random.split(k)
        w = 0.02 * jax.random.normal(kw, (c_out, c_in, ks), jnp.float32)
        b = 0.02 * jax.random.normal(kb, (c_out,), jnp.float32)
        return w, b

    keys = jax.random.split(key, len(num_chs) + 1)
    layers = []
    # pre: Conv1d(in_ch, num_chs[0], 9, stride=1, padding=4) + LeakyReLU(0.2)
    w, b = make(keys[0], num_chs[0], in_ch, 9)
    layers.append(dict(w=w, b=b, stride=1, padding=4, leaky=0.2))
    # stack: Conv1d(num_chs[i-1], num_chs[i], 24, stride=4, padding=10) + LeakyReLU(0.2)
    for i in range(1, len(num_chs)):
        w, b = make(keys[i], num_chs[i], num_chs[i - 1], kernel_size)
        layers.append(dict(w=w, b=b, stride=stride, padding=padding, leaky=0.2))
    # final: Conv1d(num_chs[-1], 1, kernel_size=3, stride=1, padding=1)
    w, b = make(keys[-1], 1, num_chs[-1], 3)
    layers.append(dict(w=w, b=b, stride=1, padding=1, leaky=None))
    return layers


def module_discriminator_forward(params, x):
    """Forward of ModuleDiscriminator: returns results[-1] (final conv output)."""
    h = x.astype(jnp.bfloat16)                 # bf16 activations between layers
    for i, layer in enumerate(params):
        last = i == len(params) - 1
        h = conv1d_pallas(
            h, layer["w"], layer["b"],
            stride=layer["stride"], padding=layer["padding"],
            negative_slope=layer["leaky"],
            out_dtype=jnp.float32 if last else jnp.bfloat16,
        )
    return h


def _reference_forward(params, x):
    """Pure-JAX reference (lax.conv) with the same bf16-operand / f32-accumulate policy."""
    h = x.astype(jnp.bfloat16)
    for i, layer in enumerate(params):
        out = jax.lax.conv_general_dilated(
            h, layer["w"].astype(jnp.bfloat16),
            window_strides=(layer["stride"],),
            padding=[(layer["padding"], layer["padding"])],
            dimension_numbers=("NCH", "OIH", "NCH"),
            preferred_element_type=jnp.float32,
        )
        out = out + layer["b"][None, :, None]
        if layer["leaky"] is not None:
            out = jnp.where(out >= 0, out, out * layer["leaky"])
        last = i == len(params) - 1
        h = out.astype(jnp.float32 if last else jnp.bfloat16)
    return h


if __name__ == "__main__":
    # Small, forward-consistent config: in_ch=4, num_chs=[8, 16] (window_size / cont unused).
    in_ch = 4
    num_chs = [8, 16]
    B, L = 2, 64

    key = jax.random.PRNGKey(0)
    kx, kp = jax.random.split(key)
    x = jax.random.normal(kx, (B, in_ch, L), jnp.float32)
    params = init_discriminator_params(kp, in_ch, num_chs)

    fwd = jax.jit(lambda xx: module_discriminator_forward(params, xx))
    out = jax.block_until_ready(fwd(x))

    ref = jax.block_until_ready(jax.jit(lambda xx: _reference_forward(params, xx))(x))

    assert out.shape == ref.shape == (B, 1, 16), (out.shape, ref.shape)
    max_err = float(jnp.max(jnp.abs(out - ref)))
    assert jnp.allclose(out, ref, atol=1e-3, rtol=1e-3), max_err

    print("KERNEL_OK")
</pallas_src>

<mosaic_0001>
module attributes {stable_mosaic.version = 11 : i64} {
  func.func @_conv_taps_kernel(%arg0: i32, %arg1: i32, %arg2: memref<1x4x128xbf16, #tpu.memory_space<vmem>>, %arg3: memref<1x4x128xbf16, #tpu.memory_space<vmem>>, %arg4: memref<9x8x4xbf16, #tpu.memory_space<vmem>>, %arg5: memref<8x1xf32, #tpu.memory_space<vmem>>, %arg6: memref<1x8x128xbf16, #tpu.memory_space<vmem>>) attributes {dimension_semantics = [#tpu.dimension_semantics<parallel>, #tpu.dimension_semantics<parallel>], iteration_bounds = array<i64: 2, 1>, scalar_prefetch = 0 : i64, scratch_operands = 0 : i64, tpu.core_type = #tpu.core_type<tc>, window_params = [{transform_indices = @transform_0, window_bounds = array<i64: 1, 4, 128>}, {transform_indices = @transform_1, window_bounds = array<i64: 1, 4, 128>}, {pipeline_mode = #tpu.pipeline_mode<synchronous>, transform_indices = @transform_2, window_bounds = array<i64: 9, 8, 4>}, {pipeline_mode = #tpu.pipeline_mode<synchronous>, transform_indices = @transform_3, window_bounds = array<i64: 8, 1>}, {transform_indices = @transform_4, window_bounds = array<i64: 1, 8, 128>}]} {
    %c0 = arith.constant 0 : index
    %c0_0 = arith.constant 0 : index
    %c0_1 = arith.constant 0 : index
    %0 = vector.load %arg2[%c0, %c0_0, %c0_1] : memref<1x4x128xbf16, #tpu.memory_space<vmem>>, vector<1x4x128xbf16>
    %1 = vector.shape_cast %0 : vector<1x4x128xbf16> to vector<4x128xbf16>
    %c0_2 = arith.constant 0 : index
    %c0_3 = arith.constant 0 : index
    %c0_4 = arith.constant 0 : index
    %2 = vector.load %arg3[%c0_2, %c0_3, %c0_4] : memref<1x4x128xbf16, #tpu.memory_space<vmem>>, vector<1x4x128xbf16>
    %3 = vector.shape_cast %2 : vector<1x4x128xbf16> to vector<4x128xbf16>
    %4 = tpu.concatenate %1, %3 in 1 : vector<4x128xbf16>, vector<4x128xbf16> -> vector<4x256xbf16>
    %cst = arith.constant 0.000000e+00 : f32
    %5 = vector.broadcast %cst : f32 to vector<8x128xf32>
    %c0_5 = arith.constant 0 : index
    %c0_6 = arith.constant 0 : index
    %c0_7 = arith.constant 0 : index
    %6 = vector.load %arg4[%c0_5, %c0_6, %c0_7] : memref<9x8x4xbf16, #tpu.memory_space<vmem>>, vector<1x8x4xbf16>
    %7 = vector.shape_cast %6 : vector<1x8x4xbf16> to vector<8x4xbf16>
    %8 = vector.extract_strided_slice %4 {offsets = [0, 0], sizes = [4, 128], strides = [1, 1]} : vector<4x256xbf16> to vector<4x128xbf16>
    %cst_8 = arith.constant dense<0.000000e+00> : vector<8x128xf32>
    %9 = tpu.matmul %7, %8, %cst_8 {dimension_numbers = #tpu.dot_dimension_numbers<[1], [0], [0], [1], [0, 0, 1, 1], [], []>} : vector<8x4xbf16>, vector<4x128xbf16>, vector<8x128xf32> -> vector<8x128xf32>
    %10 = arith.addf %5, %9 : vector<8x128xf32>
    %c1 = arith.constant 1 : index
    %c0_9 = arith.constant 0 : index
    %c0_10 = arith.constant 0 : index
    %11 = vector.load %arg4[%c1, %c0_9, %c0_10] : memref<9x8x4xbf16, #tpu.memory_space<vmem>>, vector<1x8x4xbf16>
    %12 = vector.shape_cast %11 : vector<1x8x4xbf16> to vector<8x4xbf16>
    %13 = vector.extract_strided_slice %4 {offsets = [0, 1], sizes = [4, 128], strides = [1, 1]} : vector<4x256xbf16> to vector<4x128xbf16>
    %cst_11 = arith.constant dense<0.000000e+00> : vector<8x128xf32>
    %14 = tpu.matmul %12, %13, %cst_11 {dimension_numbers = #tpu.dot_dimension_numbers<[1], [0], [0], [1], [0, 0, 1, 1], [], []>} : vector<8x4xbf16>, vector<4x128xbf16>, vector<8x128xf32> -> vector<8x128xf32>
    %15 = arith.addf %10, %14 : vector<8x128xf32>
    %c2 = arith.constant 2 : index
    %c0_12 = arith.constant 0 : index
    %c0_13 = arith.constant 0 : index
    %16 = vector.load %arg4[%c2, %c0_12, %c0_13] : memref<9x8x4xbf16, #tpu.memory_space<vmem>>, vector<1x8x4xbf16>
    %17 = vector.shape_cast %16 : vector<1x8x4xbf16> to vector<8x4xbf16>
    %18 = vector.extract_strided_slice %4 {offsets = [0, 2], sizes = [4, 128], strides = [1, 1]} : vector<4x256xbf16> to vector<4x128xbf16>
    %cst_14 = arith.constant dense<0.000000e+00> : vector<8x128xf32>
    %19 = tpu.matmul %17, %18, %cst_14 {dimension_numbers = #tpu.dot_dimension_numbers<[1], [0], [0], [1], [0, 0, 1, 1], [], []>} : vector<8x4xbf16>, vector<4x128xbf16>, vector<8x128xf32> -> vector<8x128xf32>
    %20 = arith.addf %15, %19 : vector<8x128xf32>
    %c3 = arith.constant 3 : index
    %c0_15 = arith.constant 0 : index
    %c0_16 = arith.constant 0 : index
    %21 = vector.load %arg4[%c3, %c0_15, %c0_16] : memref<9x8x4xbf16, #tpu.memory_space<vmem>>, vector<1x8x4xbf16>
    %22 = vector.shape_cast %21 : vector<1x8x4xbf16> to vector<8x4xbf16>
    %23 = vector.extract_strided_slice %4 {offsets = [0, 3], sizes = [4, 128], strides = [1, 1]} : vector<4x256xbf16> to vector<4x128xbf16>
    %cst_17 = arith.constant dense<0.000000e+00> : vector<8x128xf32>
    %24 = tpu.matmul %22, %23, %cst_17 {dimension_numbers = #tpu.dot_dimension_numbers<[1], [0], [0], [1], [0, 0, 1, 1], [], []>} : vector<8x4xbf16>, vector<4x128xbf16>, vector<8x128xf32> -> vector<8x128xf32>
    %25 = arith.addf %20, %24 : vector<8x128xf32>
    %c4 = arith.constant 4 : index
    %c0_18 = arith.constant 0 : index
    %c0_19 = arith.constant 0 : index
    %26 = vector.load %arg4[%c4, %c0_18, %c0_19] : memref<9x8x4xbf16, #tpu.memory_space<vmem>>, vector<1x8x4xbf16>
    %27 = vector.shape_cast %26 : vector<1x8x4xbf16> to vector<8x4xbf16>
    %28 = vector.extract_strided_slice %4 {offsets = [0, 4], sizes = [4, 128], strides = [1, 1]} : vector<4x256xbf16> to vector<4x128xbf16>
    %cst_20 = arith.constant dense<0.000000e+00> : vector<8x128xf32>
    %29 = tpu.matmul %27, %28, %cst_20 {dimension_numbers = #tpu.dot_dimension_numbers<[1], [0], [0], [1], [0, 0, 1, 1], [], []>} : vector<8x4xbf16>, vector<4x128xbf16>, vector<8x128xf32> -> vector<8x128xf32>
    %30 = arith.addf %25, %29 : vector<8x128xf32>
    %c5 = arith.constant 5 : index
    %c0_21 = arith.constant 0 : index
    %c0_22 = arith.constant 0 : index
    %31 = vector.load %arg4[%c5, %c0_21, %c0_22] : memref<9x8x4xbf16, #tpu.memory_space<vmem>>, vector<1x8x4xbf16>
    %32 = vector.shape_cast %31 : vector<1x8x4xbf16> to vector<8x4xbf16>
    %33 = vector.extract_strided_slice %4 {offsets = [0, 5], sizes = [4, 128], strides = [1, 1]} : vector<4x256xbf16> to vector<4x128xbf16>
    %cst_23 = arith.constant dense<0.000000e+00> : vector<8x128xf32>
    %34 = tpu.matmul %32, %33, %cst_23 {dimension_numbers = #tpu.dot_dimension_numbers<[1], [0], [0], [1], [0, 0, 1, 1], [], []>} : vector<8x4xbf16>, vector<4x128xbf16>, vector<8x128xf32> -> vector<8x128xf32>
    %35 = arith.addf %30, %34 : vector<8x128xf32>
    %c6 = arith.constant 6 : index
    %c0_24 = arith.constant 0 : index
    %c0_25 = arith.constant 0 : index
    %36 = vector.load %arg4[%c6, %c0_24, %c0_25] : memref<9x8x4xbf16, #tpu.memory_space<vmem>>, vector<1x8x4xbf16>
    %37 = vector.shape_cast %36 : vector<1x8x4xbf16> to vector<8x4xbf16>
    %38 = vector.extract_strided_slice %4 {offsets = [0, 6], sizes = [4, 128], strides = [1, 1]} : vector<4x256xbf16> to vector<4x128xbf16>
    %cst_26 = arith.constant dense<0.000000e+00> : vector<8x128xf32>
    %39 = tpu.matmul %37, %38, %cst_26 {dimension_numbers = #tpu.dot_dimension_numbers<[1], [0], [0], [1], [0, 0, 1, 1], [], []>} : vector<8x4xbf16>, vector<4x128xbf16>, vector<8x128xf32> -> vector<8x128xf32>
    %40 = arith.addf %35, %39 : vector<8x128xf32>
    %c7 = arith.constant 7 : index
    %c0_27 = arith.constant 0 : index
    %c0_28 = arith.constant 0 : index
    %41 = vector.load %arg4[%c7, %c0_27, %c0_28] : memref<9x8x4xbf16, #tpu.memory_space<vmem>>, vector<1x8x4xbf16>
    %42 = vector.shape_cast %41 : vector<1x8x4xbf16> to vector<8x4xbf16>
    %43 = vector.extract_strided_slice %4 {offsets = [0, 7], sizes = [4, 128], strides = [1, 1]} : vector<4x256xbf16> to vector<4x128xbf16>
    %cst_29 = arith.constant dense<0.000000e+00> : vector<8x128xf32>
    %44 = tpu.matmul %42, %43, %cst_29 {dimension_numbers = #tpu.dot_dimension_numbers<[1], [0], [0], [1], [0, 0, 1, 1], [], []>} : vector<8x4xbf16>, vector<4x128xbf16>, vector<8x128xf32> -> vector<8x128xf32>
    %45 = arith.addf %40, %44 : vector<8x128xf32>
    %c8 = arith.constant 8 : index
    %c0_30 = arith.constant 0 : index
    %c0_31 = arith.constant 0 : index
    %46 = vector.load %arg4[%c8, %c0_30, %c0_31] : memref<9x8x4xbf16, #tpu.memory_space<vmem>>, vector<1x8x4xbf16>
    %47 = vector.shape_cast %46 : vector<1x8x4xbf16> to vector<8x4xbf16>
    %48 = vector.extract_strided_slice %4 {offsets = [0, 8], sizes = [4, 128], strides = [1, 1]} : vector<4x256xbf16> to vector<4x128xbf16>
    %cst_32 = arith.constant dense<0.000000e+00> : vector<8x128xf32>
    %49 = tpu.matmul %47, %48, %cst_32 {dimension_numbers = #tpu.dot_dimension_numbers<[1], [0], [0], [1], [0, 0, 1, 1], [], []>} : vector<8x4xbf16>, vector<4x128xbf16>, vector<8x128xf32> -> vector<8x128xf32>
    %50 = arith.addf %45, %49 : vector<8x128xf32>
    %c0_33 = arith.constant 0 : index
    %c0_34 = arith.constant 0 : index
    %51 = vector.load %arg5[%c0_33, %c0_34] : memref<8x1xf32, #tpu.memory_space<vmem>>, vector<8x1xf32>
    %52 = vector.broadcast %51 : vector<8x1xf32> to vector<8x128xf32>
    %53 = arith.addf %50, %52 : vector<8x128xf32>
    %cst_35 = arith.constant 0.000000e+00 : f32
    %54 = vector.broadcast %cst_35 : f32 to vector<8x128xf32>
    %55 = arith.cmpf oge, %53, %54 : vector<8x128xf32>
    %cst_36 = arith.constant 2.000000e-01 : f32
    %56 = vector.broadcast %cst_36 : f32 to vector<8x128xf32>
    %57 = arith.mulf %53, %56 : vector<8x128xf32>
    %58 = arith.select %55, %53, %57 : vector<8x128xi1>, vector<8x128xf32>
    %59 = arith.truncf %58 : vector<8x128xf32> to vector<8x128xbf16>
    %c0_37 = arith.constant 0 : index
    %c0_38 = arith.constant 0 : index
    %c0_39 = arith.constant 0 : index
    %60 = vector.load %arg6[%c0_37, %c0_38, %c0_39] : memref<1x8x128xbf16, #tpu.memory_space<vmem>>, vector<1x8x128xbf16>
    %61 = vector.shape_cast %60 : vector<1x8x128xbf16> to vector<8x128xbf16>
    %62 = vector.shape_cast %59 : vector<8x128xbf16> to vector<1x8x128xbf16>
    tpu.vector_store %arg6[%c0_37, %c0_38, %c0_39], %62 {strides = array<i32>} : memref<1x8x128xbf16, #tpu.memory_space<vmem>>, vector<1x8x128xbf16>,
    return
  }
  func.func @transform_0(%arg0: i32, %arg1: i32) -> (i32, i32, i32) {
    %c0_i32 = arith.constant 0 : i32
    %c0_i32_0 = arith.constant 0 : i32
    return %arg0, %c0_i32, %arg1 : i32, i32, i32
  }
  func.func @transform_1(%arg0: i32, %arg1: i32) -> (i32, i32, i32) {
    %c1_i32 = arith.constant 1 : i32
    %0 = arith.addi %arg1, %c1_i32 : i32
    %c1_i32_0 = arith.constant 1 : i32
    %1 = arith.muli %0, %c1_i32_0 : i32
    %c0_i32 = arith.constant 0 : i32
    %c0_i32_1 = arith.constant 0 : i32
    return %arg0, %c0_i32, %1 : i32, i32, i32
  }
  func.func @transform_2(%arg0: i32, %arg1: i32) -> (i32, i32, i32) {
    %c0_i32 = arith.constant 0 : i32
    %c0_i32_0 = arith.constant 0 : i32
    %c0_i32_1 = arith.constant 0 : i32
    %c0_i32_2 = arith.constant 0 : i32
    return %c0_i32, %c0_i32_0, %c0_i32_1 : i32, i32, i32
  }
  func.func @transform_3(%arg0: i32, %arg1: i32) -> (i32, i32) {
    %c0_i32 = arith.constant 0 : i32
    %c0_i32_0 = arith.constant 0 : i32
    %c0_i32_1 = arith.constant 0 : i32
    return %c0_i32, %c0_i32_0 : i32, i32
  }
  func.func @transform_4(%arg0: i32, %arg1: i32) -> (i32, i32, i32) {
    %c0_i32 = arith.constant 0 : i32
    %c0_i32_0 = arith.constant 0 : i32
    return %arg0, %c0_i32, %arg1 : i32, i32, i32
  }
}

module attributes {stable_mosaic.version = 11 : i64} {
  func.func @_conv_taps_kernel(%arg0: i32, %arg1: i32, %arg2: memref<1x32x128xbf16, #tpu.memory_space<vmem>>, %arg3: memref<1x32x128xbf16, #tpu.memory_space<vmem>>, %arg4: memref<6x16x32xbf16, #tpu.memory_space<vmem>>, %arg5: memref<16x1xf32, #tpu.memory_space<vmem>>, %arg6: memref<1x16x128xbf16, #tpu.memory_space<vmem>>) attributes {dimension_semantics = [#tpu.dimension_semantics<parallel>, #tpu.dimension_semantics<parallel>], iteration_bounds = array<i64: 2, 1>, scalar_prefetch = 0 : i64, scratch_operands = 0 : i64, tpu.core_type = #tpu.core_type<tc>, window_params = [{transform_indices = @transform_0, window_bounds = array<i64: 1, 32, 128>}, {transform_indices = @transform_1, window_bounds = array<i64: 1, 32, 128>}, {pipeline_mode = #tpu.pipeline_mode<synchronous>, transform_indices = @transform_2, window_bounds = array<i64: 6, 16, 32>}, {pipeline_mode = #tpu.pipeline_mode<synchronous>, transform_indices = @transform_3, window_bounds = array<i64: 16, 1>}, {transform_indices = @transform_4, window_bounds = array<i64: 1, 16, 128>}]} {
    %c0 = arith.constant 0 : index
    %c0_0 = arith.constant 0 : index
    %c0_1 = arith.constant 0 : index
    %0 = vector.load %arg2[%c0, %c0_0, %c0_1] : memref<1x32x128xbf16, #tpu.memory_space<vmem>>, vector<1x32x128xbf16>
    %1 = vector.shape_cast %0 : vector<1x32x128xbf16> to vector<32x128xbf16>
    %c0_2 = arith.constant 0 : index
    %c0_3 = arith.constant 0 : index
    %c0_4 = arith.constant 0 : index
    %2 = vector.load %arg3[%c0_2, %c0_3, %c0_4] : memref<1x32x128xbf16, #tpu.memory_space<vmem>>, vector<1x32x128xbf16>
    %3 = vector.shape_cast %2 : vector<1x32x128xbf16> to vector<32x128xbf16>
    %4 = tpu.concatenate %1, %3 in 1 : vector<32x128xbf16>, vector<32x128xbf16> -> vector<32x256xbf16>
    %cst = arith.constant 0.000000e+00 : f32
    %5 = vector.broadcast %cst : f32 to vector<16x128xf32>
    %c0_5 = arith.constant 0 : index
    %c0_6 = arith.constant 0 : index
    %c0_7 = arith.constant 0 : index
    %6 = vector.load %arg4[%c0_5, %c0_6, %c0_7] : memref<6x16x32xbf16, #tpu.memory_space<vmem>>, vector<1x16x32xbf16>
    %7 = vector.shape_cast %6 : vector<1x16x32xbf16> to vector<16x32xbf16>
    %8 = vector.extract_strided_slice %4 {offsets = [0, 0], sizes = [32, 128], strides = [1, 1]} : vector<32x256xbf16> to vector<32x128xbf16>
    %cst_8 = arith.constant dense<0.000000e+00> : vector<16x128xf32>
    %9 = tpu.matmul %7, %8, %cst_8 {dimension_numbers = #tpu.dot_dimension_numbers<[1], [0], [0], [1], [0, 0, 1, 1], [], []>} : vector<16x32xbf16>, vector<32x128xbf16>, vector<16x128xf32> -> vector<16x128xf32>
    %10 = arith.addf %5, %9 : vector<16x128xf32>
    %c1 = arith.constant 1 : index
    %c0_9 = arith.constant 0 : index
    %c0_10 = arith.constant 0 : index
    %11 = vector.load %arg4[%c1, %c0_9, %c0_10] : memref<6x16x32xbf16, #tpu.memory_space<vmem>>, vector<1x16x32xbf16>
    %12 = vector.shape_cast %11 : vector<1x16x32xbf16> to vector<16x32xbf16>
    %13 = vector.extract_strided_slice %4 {offsets = [0, 1], sizes = [32, 128], strides = [1, 1]} : vector<32x256xbf16> to vector<32x128xbf16>
    %cst_11 = arith.constant dense<0.000000e+00> : vector<16x128xf32>
    %14 = tpu.matmul %12, %13, %cst_11 {dimension_numbers = #tpu.dot_dimension_numbers<[1], [0], [0], [1], [0, 0, 1, 1], [], []>} : vector<16x32xbf16>, vector<32x128xbf16>, vector<16x128xf32> -> vector<16x128xf32>
    %15 = arith.addf %10, %14 : vector<16x128xf32>
    %c2 = arith.constant 2 : index
    %c0_12 = arith.constant 0 : index
    %c0_13 = arith.constant 0 : index
    %16 = vector.load %arg4[%c2, %c0_12, %c0_13] : memref<6x16x32xbf16, #tpu.memory_space<vmem>>, vector<1x16x32xbf16>
    %17 = vector.shape_cast %16 : vector<1x16x32xbf16> to vector<16x32xbf16>
    %18 = vector.extract_strided_slice %4 {offsets = [0, 2], sizes = [32, 128], strides = [1, 1]} : vector<32x256xbf16> to vector<32x128xbf16>
    %cst_14 = arith.constant dense<0.000000e+00> : vector<16x128xf32>
    %19 = tpu.matmul %17, %18, %cst_14 {dimension_numbers = #tpu.dot_dimension_numbers<[1], [0], [0], [1], [0, 0, 1, 1], [], []>} : vector<16x32xbf16>, vector<32x128xbf16>, vector<16x128xf32> -> vector<16x128xf32>
    %20 = arith.addf %15, %19 : vector<16x128xf32>
    %c3 = arith.constant 3 : index
    %c0_15 = arith.constant 0 : index
    %c0_16 = arith.constant 0 : index
    %21 = vector.load %arg4[%c3, %c0_15, %c0_16] : memref<6x16x32xbf16, #tpu.memory_space<vmem>>, vector<1x16x32xbf16>
    %22 = vector.shape_cast %21 : vector<1x16x32xbf16> to vector<16x32xbf16>
    %23 = vector.extract_strided_slice %4 {offsets = [0, 3], sizes = [32, 128], strides = [1, 1]} : vector<32x256xbf16> to vector<32x128xbf16>
    %cst_17 = arith.constant dense<0.000000e+00> : vector<16x128xf32>
    %24 = tpu.matmul %22, %23, %cst_17 {dimension_numbers = #tpu.dot_dimension_numbers<[1], [0], [0], [1], [0, 0, 1, 1], [], []>} : vector<16x32xbf16>, vector<32x128xbf16>, vector<16x128xf32> -> vector<16x128xf32>
    %25 = arith.addf %20, %24 : vector<16x128xf32>
    %c4 = arith.constant 4 : index
    %c0_18 = arith.constant 0 : index
    %c0_19 = arith.constant 0 : index
    %26 = vector.load %arg4[%c4, %c0_18, %c0_19] : memref<6x16x32xbf16, #tpu.memory_space<vmem>>, vector<1x16x32xbf16>
    %27 = vector.shape_cast %26 : vector<1x16x32xbf16> to vector<16x32xbf16>
    %28 = vector.extract_strided_slice %4 {offsets = [0, 4], sizes = [32, 128], strides = [1, 1]} : vector<32x256xbf16> to vector<32x128xbf16>
    %cst_20 = arith.constant dense<0.000000e+00> : vector<16x128xf32>
    %29 = tpu.matmul %27, %28, %cst_20 {dimension_numbers = #tpu.dot_dimension_numbers<[1], [0], [0], [1], [0, 0, 1, 1], [], []>} : vector<16x32xbf16>, vector<32x128xbf16>, vector<16x128xf32> -> vector<16x128xf32>
    %30 = arith.addf %25, %29 : vector<16x128xf32>
    %c5 = arith.constant 5 : index
    %c0_21 = arith.constant 0 : index
    %c0_22 = arith.constant 0 : index
    %31 = vector.load %arg4[%c5, %c0_21, %c0_22] : memref<6x16x32xbf16, #tpu.memory_space<vmem>>, vector<1x16x32xbf16>
    %32 = vector.shape_cast %31 : vector<1x16x32xbf16> to vector<16x32xbf16>
    %33 = vector.extract_strided_slice %4 {offsets = [0, 5], sizes = [32, 128], strides = [1, 1]} : vector<32x256xbf16> to vector<32x128xbf16>
    %cst_23 = arith.constant dense<0.000000e+00> : vector<16x128xf32>
    %34 = tpu.matmul %32, %33, %cst_23 {dimension_numbers = #tpu.dot_dimension_numbers<[1], [0], [0], [1], [0, 0, 1, 1], [], []>} : vector<16x32xbf16>, vector<32x128xbf16>, vector<16x128xf32> -> vector<16x128xf32>
    %35 = arith.addf %30, %34 : vector<16x128xf32>
    %c0_24 = arith.constant 0 : index
    %c0_25 = arith.constant 0 : index
    %36 = vector.load %arg5[%c0_24, %c0_25] : memref<16x1xf32, #tpu.memory_space<vmem>>, vector<16x1xf32>
    %37 = vector.broadcast %36 : vector<16x1xf32> to vector<16x128xf32>
    %38 = arith.addf %35, %37 : vector<16x128xf32>
    %cst_26 = arith.constant 0.000000e+00 : f32
    %39 = vector.broadcast %cst_26 : f32 to vector<16x128xf32>
    %40 = arith.cmpf oge, %38, %39 : vector<16x128xf32>
    %cst_27 = arith.constant 2.000000e-01 : f32
    %41 = vector.broadcast %cst_27 : f32 to vector<16x128xf32>
    %42 = arith.mulf %38, %41 : vector<16x128xf32>
    %43 = arith.select %40, %38, %42 : vector<16x128xi1>, vector<16x128xf32>
    %44 = arith.truncf %43 : vector<16x128xf32> to vector<16x128xbf16>
    %c0_28 = arith.constant 0 : index
    %c0_29 = arith.constant 0 : index
    %c0_30 = arith.constant 0 : index
    %45 = vector.load %arg6[%c0_28, %c0_29, %c0_30] : memref<1x16x128xbf16, #tpu.memory_space<vmem>>, vector<1x16x128xbf16>
    %46 = vector.shape_cast %45 : vector<1x16x128xbf16> to vector<16x128xbf16>
    %47 = vector.shape_cast %44 : vector<16x128xbf16> to vector<1x16x128xbf16>
    tpu.vector_store %arg6[%c0_28, %c0_29, %c0_30], %47 {strides = array<i32>} : memref<1x16x128xbf16, #tpu.memory_space<vmem>>, vector<1x16x128xbf16>,
    return
  }
  func.func @transform_0(%arg0: i32, %arg1: i32) -> (i32, i32, i32) {
    %c0_i32 = arith.constant 0 : i32
    %c0_i32_0 = arith.constant 0 : i32
    return %arg0, %c0_i32, %arg1 : i32, i32, i32
  }
  func.func @transform_1(%arg0: i32, %arg1: i32) -> (i32, i32, i32) {
    %c1_i32 = arith.constant 1 : i32
    %0 = arith.addi %arg1, %c1_i32 : i32
    %c1_i32_0 = arith.constant 1 : i32
    %1 = arith.muli %0, %c1_i32_0 : i32
    %c0_i32 = arith.constant 0 : i32
    %c0_i32_1 = arith.constant 0 : i32
    return %arg0, %c0_i32, %1 : i32, i32, i32
  }
  func.func @transform_2(%arg0: i32, %arg1: i32) -> (i32, i32, i32) {
    %c0_i32 = arith.constant 0 : i32
    %c0_i32_0 = arith.constant 0 : i32
    %c0_i32_1 = arith.constant 0 : i32
    %c0_i32_2 = arith.constant 0 : i32
    return %c0_i32, %c0_i32_0, %c0_i32_1 : i32, i32, i32
  }
  func.func @transform_3(%arg0: i32, %arg1: i32) -> (i32, i32) {
    %c0_i32 = arith.constant 0 : i32
    %c0_i32_0 = arith.constant 0 : i32
    %c0_i32_1 = arith.constant 0 : i32
    return %c0_i32, %c0_i32_0 : i32, i32
  }
  func.func @transform_4(%arg0: i32, %arg1: i32) -> (i32, i32, i32) {
    %c0_i32 = arith.constant 0 : i32
    %c0_i32_0 = arith.constant 0 : i32
    return %arg0, %c0_i32, %arg1 : i32, i32, i32
  }
}

module attributes {stable_mosaic.version = 11 : i64} {
  func.func @_conv_taps_kernel(%arg0: i32, %arg1: i32, %arg2: memref<1x16x128xbf16, #tpu.memory_space<vmem>>, %arg3: memref<1x16x128xbf16, #tpu.memory_space<vmem>>, %arg4: memref<3x1x16xbf16, #tpu.memory_space<vmem>>, %arg5: memref<1x1xf32, #tpu.memory_space<vmem>>, %arg6: memref<1x1x128xf32, #tpu.memory_space<vmem>>) attributes {dimension_semantics = [#tpu.dimension_semantics<parallel>, #tpu.dimension_semantics<parallel>], iteration_bounds = array<i64: 2, 1>, scalar_prefetch = 0 : i64, scratch_operands = 0 : i64, tpu.core_type = #tpu.core_type<tc>, window_params = [{transform_indices = @transform_0, window_bounds = array<i64: 1, 16, 128>}, {transform_indices = @transform_1, window_bounds = array<i64: 1, 16, 128>}, {pipeline_mode = #tpu.pipeline_mode<synchronous>, transform_indices = @transform_2, window_bounds = array<i64: 3, 1, 16>}, {pipeline_mode = #tpu.pipeline_mode<synchronous>, transform_indices = @transform_3, window_bounds = array<i64: 1, 1>}, {transform_indices = @transform_4, window_bounds = array<i64: 1, 1, 128>}]} {
    %c0 = arith.constant 0 : index
    %c0_0 = arith.constant 0 : index
    %c0_1 = arith.constant 0 : index
    %0 = vector.load %arg2[%c0, %c0_0, %c0_1] : memref<1x16x128xbf16, #tpu.memory_space<vmem>>, vector<1x16x128xbf16>
    %1 = vector.shape_cast %0 : vector<1x16x128xbf16> to vector<16x128xbf16>
    %c0_2 = arith.constant 0 : index
    %c0_3 = arith.constant 0 : index
    %c0_4 = arith.constant 0 : index
    %2 = vector.load %arg3[%c0_2, %c0_3, %c0_4] : memref<1x16x128xbf16, #tpu.memory_space<vmem>>, vector<1x16x128xbf16>
    %3 = vector.shape_cast %2 : vector<1x16x128xbf16> to vector<16x128xbf16>
    %4 = tpu.concatenate %1, %3 in 1 : vector<16x128xbf16>, vector<16x128xbf16> -> vector<16x256xbf16>
    %cst = arith.constant 0.000000e+00 : f32
    %5 = vector.broadcast %cst : f32 to vector<1x128xf32>
    %c0_5 = arith.constant 0 : index
    %c0_6 = arith.constant 0 : index
    %c0_7 = arith.constant 0 : index
    %6 = vector.load %arg4[%c0_5, %c0_6, %c0_7] : memref<3x1x16xbf16, #tpu.memory_space<vmem>>, vector<1x1x16xbf16>
    %7 = vector.shape_cast %6 : vector<1x1x16xbf16> to vector<1x16xbf16>
    %8 = vector.extract_strided_slice %4 {offsets = [0, 0], sizes = [16, 128], strides = [1, 1]} : vector<16x256xbf16> to vector<16x128xbf16>
    %cst_8 = arith.constant dense<0.000000e+00> : vector<1x128xf32>
    %9 = tpu.matmul %7, %8, %cst_8 {dimension_numbers = #tpu.dot_dimension_numbers<[1], [0], [0], [1], [0, 0, 1, 1], [], []>} : vector<1x16xbf16>, vector<16x128xbf16>, vector<1x128xf32> -> vector<1x128xf32>
    %10 = arith.addf %5, %9 : vector<1x128xf32>
    %c1 = arith.constant 1 : index
    %c0_9 = arith.constant 0 : index
    %c0_10 = arith.constant 0 : index
    %11 = vector.load %arg4[%c1, %c0_9, %c0_10] : memref<3x1x16xbf16, #tpu.memory_space<vmem>>, vector<1x1x16xbf16>
    %12 = vector.shape_cast %11 : vector<1x1x16xbf16> to vector<1x16xbf16>
    %13 = vector.extract_strided_slice %4 {offsets = [0, 1], sizes = [16, 128], strides = [1, 1]} : vector<16x256xbf16> to vector<16x128xbf16>
    %cst_11 = arith.constant dense<0.000000e+00> : vector<1x128xf32>
    %14 = tpu.matmul %12, %13, %cst_11 {dimension_numbers = #tpu.dot_dimension_numbers<[1], [0], [0], [1], [0, 0, 1, 1], [], []>} : vector<1x16xbf16>, vector<16x128xbf16>, vector<1x128xf32> -> vector<1x128xf32>
    %15 = arith.addf %10, %14 : vector<1x128xf32>
    %c2 = arith.constant 2 : index
    %c0_12 = arith.constant 0 : index
    %c0_13 = arith.constant 0 : index
    %16 = vector.load %arg4[%c2, %c0_12, %c0_13] : memref<3x1x16xbf16, #tpu.memory_space<vmem>>, vector<1x1x16xbf16>
    %17 = vector.shape_cast %16 : vector<1x1x16xbf16> to vector<1x16xbf16>
    %18 = vector.extract_strided_slice %4 {offsets = [0, 2], sizes = [16, 128], strides = [1, 1]} : vector<16x256xbf16> to vector<16x128xbf16>
    %cst_14 = arith.constant dense<0.000000e+00> : vector<1x128xf32>
    %19 = tpu.matmul %17, %18, %cst_14 {dimension_numbers = #tpu.dot_dimension_numbers<[1], [0], [0], [1], [0, 0, 1, 1], [], []>} : vector<1x16xbf16>, vector<16x128xbf16>, vector<1x128xf32> -> vector<1x128xf32>
    %20 = arith.addf %15, %19 : vector<1x128xf32>
    %c0_15 = arith.constant 0 : index
    %c0_16 = arith.constant 0 : index
    %21 = vector.load %arg5[%c0_15, %c0_16] : memref<1x1xf32, #tpu.memory_space<vmem>>, vector<1x1xf32>
    %22 = vector.broadcast %21 : vector<1x1xf32> to vector<1x128xf32>
    %23 = arith.addf %20, %22 : vector<1x128xf32>
    %c0_17 = arith.constant 0 : index
    %c0_18 = arith.constant 0 : index
    %c0_19 = arith.constant 0 : index
    %24 = vector.load %arg6[%c0_17, %c0_18, %c0_19] : memref<1x1x128xf32, #tpu.memory_space<vmem>>, vector<1x1x128xf32>
    %25 = vector.shape_cast %24 : vector<1x1x128xf32> to vector<1x128xf32>
    %26 = vector.shape_cast %23 : vector<1x128xf32> to vector<1x1x128xf32>
    tpu.vector_store %arg6[%c0_17, %c0_18, %c0_19], %26 {strides = array<i32>} : memref<1x1x128xf32, #tpu.memory_space<vmem>>, vector<1x1x128xf32>,
    return
  }
  func.func @transform_0(%arg0: i32, %arg1: i32) -> (i32, i32, i32) {
    %c0_i32 = arith.constant 0 : i32
    %c0_i32_0 = arith.constant 0 : i32
    return %arg0, %c0_i32, %arg1 : i32, i32, i32
  }
  func.func @transform_1(%arg0: i32, %arg1: i32) -> (i32, i32, i32) {
    %c1_i32 = arith.constant 1 : i32
    %0 = arith.addi %arg1, %c1_i32 : i32
    %c1_i32_0 = arith.constant 1 : i32
    %1 = arith.muli %0, %c1_i32_0 : i32
    %c0_i32 = arith.constant 0 : i32
    %c0_i32_1 = arith.constant 0 : i32
    return %arg0, %c0_i32, %1 : i32, i32, i32
  }
  func.func @transform_2(%arg0: i32, %arg1: i32) -> (i32, i32, i32) {
    %c0_i32 = arith.constant 0 : i32
    %c0_i32_0 = arith.constant 0 : i32
    %c0_i32_1 = arith.constant 0 : i32
    %c0_i32_2 = arith.constant 0 : i32
    return %c0_i32, %c0_i32_0, %c0_i32_1 : i32, i32, i32
  }
  func.func @transform_3(%arg0: i32, %arg1: i32) -> (i32, i32) {
    %c0_i32 = arith.constant 0 : i32
    %c0_i32_0 = arith.constant 0 : i32
    %c0_i32_1 = arith.constant 0 : i32
    return %c0_i32, %c0_i32_0 : i32, i32
  }
  func.func @transform_4(%arg0: i32, %arg1: i32) -> (i32, i32, i32) {
    %c0_i32 = arith.constant 0 : i32
    %c0_i32_0 = arith.constant 0 : i32
    return %arg0, %c0_i32, %arg1 : i32, i32, i32
  }
}

</mosaic_0001>

<llo_original>
// kernel: _lambda_.3
$region0: #{_lambda_.3}
  #allocation0 [shape = 'u32[]', space=smem, size = 0x4, offset = 0x4, fixed_abs, tag = 'smem constant byte address 0x4 - core index']
  #allocation1 [shape = 'u32[72,128]{1,0:T(1,128)}', space=vmem, size = 0x9000, scoped, tag = 'internal scratch']
  %s0 = inlined_call_operand.vmem [shape: bf16[2,4,256], index: 0, kind: input, shape index: {}, may-alias: {0,1}]
  %s1 = inlined_call_operand.vmem [shape: bf16[2,4,256], index: 1, kind: input, shape index: {}, may-alias: {0,1}]
  %s2 = inlined_call_operand.hbm [shape: bf16[9,8,4], index: 2, kind: input, shape index: {}]
  %s3 = inlined_call_operand.vmem [shape: f32[8,1], index: 3, kind: input, shape index: {}]
  %s4 = inlined_call_operand.vmem [shape: bf16[2,8,128], index: 4, kind: output, shape index: {}]
  %s5 = sld [smem:[#allocation0]]
  $region53: #{_lambda_.3} parent=0
    _
  %s7 = ssub.s32 1, %s5
  %s8 = scalar_select 0, %s7, %s5
  $region1: #{_lambda_.3} parent=0
    #allocation2 [shape = 'u8[18432]{0}', space=vmem, size = 0x4800, scoped, tag = 'input window, operand 2, single buffered']
    #allocation3 [shape = 's32[2]{0}', space=sflag, size = 0x8, scoped, tag = 'scoped memory for _lambda_.3']
    %9 = vsyncpa [#allocation3], 0
    loop: start=0, step=1, limit=4
    $region2: #{_lambda_.3} parent=1 // loop_pre_header
      _
    $region3: #{_lambda_.3} parent=1 // loop_header
      %s11 = sphi 0, %s15
      %p12 = scmp.ge.s32.totalorder %s11, 4
      %s18 = sphi 0, %s30
      %s19 = sphi 0, %s26
      %s20 = sphi 0, %s18
      %s21 = sphi 0, %s19
      %s22 = sphi 0, %s20
      %s23 = sphi 0, %s21
      %s35 = sphi 0, %s37
      %s38 = sphi 0, %s35
      %s39 = sphi 0, %s38
      %s55 = sphi 0, %s39
      %s65 = sphi 0, %s67
      %s68 = sphi 0, %s65
      %s69 = sphi 0, %s68
      %s85 = sphi 0, %s69
      %s89 = sphi 0, %s89
      %s91 = sphi 0, %s89
      %s92 = sphi 0, %s91
      %s106 = sphi 0, %s92
      %s110 = sphi 0, %s110
      %s112 = sphi 0, %s110
      %s113 = sphi 0, %s112
      %s127 = sphi 0, %s113
      %s135 = sphi 0, %s137
      %s138 = sphi 0, %s135
      %s139 = sphi 0, %s138
      %s155 = sphi 0, %s139
    $region4: #{_lambda_.3} parent=1 // loop_header_branch
      %14 = sbr.rel (%p12) target = $region8
    $region5: #{_lambda_.3} parent=1 // loop_body
      %s16 = ssub.s32 %s11, 1
      %s17 = ssub.s32 %s11, 2
      %s24 = sadd.s32 1, %s19
      %p25 = scmp.ge.s32.totalorder %s24, 1
      %s26 = scalar_select %p25, 0, %s24
      %s27 = sadd.s32 1, %s18
      %s28 = scalar_select %p25, %s27, %s18
      %p29 = scmp.ge.s32.totalorder %s28, 2
      %s30 = scalar_select %p29, 0, %s28
      %s31 = ssub.s32 %s18, %s30
      %s32 = ssub.s32 %s19, %s26
      %s33 = sor.u32 %s31, %s32
      %p34 = scmp.eq.s32.totalorder %s33, 0
      %s36 = sadd.s32 %s35, 1
      %s37 = scalar_select %p34, %s35, %s36
      %p40 = pneg %p34
      %p41 = scmp.eq.s32.totalorder %s11, 1
      %p42 = por %p40, %p41
      %p43 = scmp.ne.s32.totalorder %s35, %s38
      %p44 = scmp.eq.s32.totalorder %s11, 0
      %p45 = por %p43, %p44
      %p46 = scmp.ne.s32.totalorder %s35, %s38
      %p47 = scmp.eq.s32.totalorder %s16, 1
      %p48 = por %p46, %p47
      %p49 = scmp.ne.s32.totalorder %s38, %s39
      %p50 = scmp.eq.s32.totalorder %s16, 0
      %p51 = por %p49, %p50
      %p52 = scmp.ne.s32.totalorder %s38, %s39
      %p53 = scmp.eq.s32.totalorder %s17, 1
      %p54 = por %p52, %p53
      %p56 = scmp.ne.s32.totalorder %s39, %s55
      %p57 = scmp.eq.s32.totalorder %s17, 0
      %p58 = por %p56, %p57
      %s59 = sadd.s32 %s19, 1
      %s60 = sadd.s32 %s26, 1
      %s61 = ssub.s32 %s18, %s30
      %s62 = ssub.s32 %s59, %s60
      %s63 = sor.u32 %s61, %s62
      %p64 = scmp.eq.s32.totalorder %s63, 0
      %s66 = sadd.s32 %s65, 1
      %s67 = scalar_select %p64, %s65, %s66
      %p70 = pneg %p64
      %p71 = scmp.eq.s32.totalorder %s11, 1
      %p72 = por %p70, %p71
      %p73 = scmp.ne.s32.totalorder %s65, %s68
      %p74 = scmp.eq.s32.totalorder %s11, 0
      %p75 = por %p73, %p74
      %p76 = scmp.ne.s32.totalorder %s65, %s68
      %p77 = scmp.eq.s32.totalorder %s16, 1
      %p78 = por %p76, %p77
      %p79 = scmp.ne.s32.totalorder %s68, %s69
      %p80 = scmp.eq.s32.totalorder %s16, 0
      %p81 = por %p79, %p80
      %p82 = scmp.ne.s32.totalorder %s68, %s69
      %p83 = scmp.eq.s32.totalorder %s17, 1
      %p84 = por %p82, %p83
      %p86 = scmp.ne.s32.totalorder %s69, %s85
      %p87 = scmp.eq.s32.totalorder %s17, 0
      %p88 = por %p86, %p87
      %s90 = sadd.s32 %s89, 1
      %p93 = scmp.eq.s32.totalorder %s11, 1
      %p94 = scmp.ne.s32.totalorder %s89, %s91
      %p95 = scmp.eq.s32.totalorder %s11, 0
      %p96 = por %p94, %p95
      %p97 = scmp.ne.s32.totalorder %s89, %s91
      %p98 = scmp.eq.s32.totalorder %s16, 1
      %p99 = por %p97, %p98
      %p100 = scmp.ne.s32.totalorder %s91, %s92
      %p101 = scmp.eq.s32.totalorder %s16, 0
      %p102 = por %p100, %p101
      %p103 = scmp.ne.s32.totalorder %s91, %s92
      %p104 = scmp.eq.s32.totalorder %s17, 1
      %p105 = por %p103, %p104
      %p107 = scmp.ne.s32.totalorder %s92, %s106
      %p108 = scmp.eq.s32.totalorder %s17, 0
      %p109 = por %p107, %p108
      %s111 = sadd.s32 %s110, 1
      %p114 = scmp.eq.s32.totalorder %s11, 1
      %p115 = scmp.ne.s32.totalorder %s110, %s112
      %p116 = scmp.eq.s32.totalorder %s11, 0
      %p117 = por %p115, %p116
      %p118 = scmp.ne.s32.totalorder %s110, %s112
      %p119 = scmp.eq.s32.totalorder %s16, 1
      %p120 = por %p118, %p119
      %p121 = scmp.ne.s32.totalorder %s112, %s113
      %p122 = scmp.eq.s32.totalorder %s16, 0
      %p123 = por %p121, %p122
      %p124 = scmp.ne.s32.totalorder %s112, %s113
      %p125 = scmp.eq.s32.totalorder %s17, 1
      %p126 = por %p124, %p125
      %p128 = scmp.ne.s32.totalorder %s113, %s127
      %p129 = scmp.eq.s32.totalorder %s17, 0
      %p130 = por %p128, %p129
      %s131 = ssub.s32 %s18, %s30
      %s132 = ssub.s32 %s19, %s26
      %s133 = sor.u32 %s131, %s132
      %p134 = scmp.eq.s32.totalorder %s133, 0
      %s136 = sadd.s32 %s135, 1
      %s137 = scalar_select %p134, %s135, %s136
      %p140 = pneg %p134
      %p141 = scmp.eq.s32.totalorder %s11, 1
      %p142 = por %p140, %p141
      %p143 = scmp.ne.s32.totalorder %s135, %s138
      %p144 = scmp.eq.s32.totalorder %s11, 0
      %p145 = por %p143, %p144
      %p146 = scmp.ne.s32.totalorder %s135, %s138
      %p147 = scmp.eq.s32.totalorder %s16, 1
      %p148 = por %p146, %p147
      %p149 = scmp.ne.s32.totalorder %s138, %s139
      %p150 = scmp.eq.s32.totalorder %s16, 0
      %p151 = por %p149, %p150
      %p152 = scmp.ne.s32.totalorder %s138, %s139
      %p153 = scmp.eq.s32.totalorder %s17, 1
      %p154 = por %p152, %p153
      %p156 = scmp.ne.s32.totalorder %s139, %s155
      %p157 = scmp.eq.s32.totalorder %s17, 0
      %p158 = por %p156, %p157
      %p159 = scmp.le.s32.totalorder 1, %s11
      %p160 = scmp.lt.s32.totalorder %s11, 3
      %p161 = pnand %p159, %p160
      %p162 = pneg %p161
      // Predicated region
      $region9: #{_lambda_.3} parent=5 // pred_check
        _
      $region10: #{_lambda_.3} parent=5 // pred_check_branch
        %164 = sbr.rel (%p161) target = $region12
      $region11: #{_lambda_.3} parent=5 // pred_region
        %s165 = ssub.s32 %s11, 1
        // Predicated region
        $region13: #{_lambda_.3} parent=11 // pred_check
          %p166 = pneg %p102
        $region14: #{_lambda_.3} parent=11 // pred_check_branch
          %168 = sbr.rel (%p166) target = $region16
        $region15: #{_lambda_.3} parent=11 // pred_region
          %170 = vsyncadd [#allocation3], 0
          %s171 = sshll.u32 %s2, 4
          %s172 = int_to_ptr.hbm [resolvable:$true] %s171
          %s173 = sshll.u32 [#allocation2], 4
          %s174 = int_to_ptr.vmem [resolvable:$true] %s173
          %179 = dma.hbm_to_vmem [thread:$0]  %s172, 576, %s174, [#allocation3], 64, 64, 4
        $region16: #{_lambda_.3} parent=11 // pred_fallthru
          _
        // Predicated region
        $region17: #{_lambda_.3} parent=11 // pred_check
          %p180 = pneg %p123
        $region18: #{_lambda_.3} parent=11 // pred_check_branch
          %182 = sbr.rel (%p180) target = $region20
        $region19: #{_lambda_.3} parent=11 // pred_region
          _
        $region20: #{_lambda_.3} parent=11 // pred_fallthru
          _
      $region12: #{_lambda_.3} parent=5 // pred_fallthru
        _
      %p183 = scmp.lt.s32.totalorder %s11, 2
      // Predicated region
      $region21: #{_lambda_.3} parent=5 // pred_check
        %p184 = pneg %p183
      $region22: #{_lambda_.3} parent=5 // pred_check_branch
        %186 = sbr.rel (%p184) target = $region24
      $region23: #{_lambda_.3} parent=5 // pred_region
        // Predicated region
        $region25: #{_lambda_.3} parent=23 // pred_check
          %p187 = pneg %p45
        $region26: #{_lambda_.3} parent=23 // pred_check_branch
          %189 = sbr.rel (%p187) target = $region28
        $region27: #{_lambda_.3} parent=23 // pred_region
          %p190 = scmp.lt.s32.totalorder %s18, 1
          %s191 = scalar_select %p190, %s18, 1
          %p192 = scmp.lt.s32.totalorder %s19, 1
          %s193 = scalar_select %p192, %s19, 1
          %s194 = smul.addr %s191, 2
          %s195 = sadd.s32 %s193, %s194
          %s196 = smul.addr %s195, 2
          %s197 = scalar_lea.vmem %s0, %s196
        $region28: #{_lambda_.3} parent=23 // pred_fallthru
          _
        // Predicated region
        $region29: #{_lambda_.3} parent=23 // pred_check
          %p198 = pneg %p75
        $region30: #{_lambda_.3} parent=23 // pred_check_branch
          %200 = sbr.rel (%p198) target = $region32
        $region31: #{_lambda_.3} parent=23 // pred_region
          %s201 = sadd.s32 %s19, 1
          %p202 = scmp.lt.s32.totalorder %s18, 1
          %s203 = scalar_select %p202, %s18, 1
          %p204 = scmp.lt.s32.totalorder %s201, 1
          %s205 = scalar_select %p204, %s201, 1
          %s206 = smul.addr %s203, 2
          %s207 = sadd.s32 %s205, %s206
          %s208 = smul.addr %s207, 2
          %s209 = scalar_lea.vmem %s1, %s208
          %s210 = sadd.s32 %s19, 1
        $region32: #{_lambda_.3} parent=23 // pred_fallthru
          _
      $region24: #{_lambda_.3} parent=5 // pred_fallthru
        _
      %p211 = scmp.le.s32.totalorder 1, %s11
      %p212 = scmp.lt.s32.totalorder %s11, 3
      %p213 = pnand %p211, %p212
      %p214 = pneg %p213
      // Predicated region
      $region33: #{_lambda_.3} parent=5 // pred_check
        _
      $region34: #{_lambda_.3} parent=5 // pred_check_branch
        %216 = sbr.rel (%p213) target = $region36
      $region35: #{_lambda_.3} parent=5 // pred_region
        %s217 = ssub.s32 %s11, 1
        // Predicated region
        $region37: #{_lambda_.3} parent=35 // pred_check
          %p218 = pneg %p102
        $region38: #{_lambda_.3} parent=35 // pred_check_branch
          %220 = sbr.rel (%p218) target = $region40
        $region39: #{_lambda_.3} parent=35 // pred_region
          %222 = dma.done [#allocation3], 576
        $region40: #{_lambda_.3} parent=35 // pred_fallthru
          _
        %p223 = scmp.lt.s32.totalorder %s20, 1
        %s224 = scalar_select %p223, %s20, 1
        %p225 = scmp.lt.s32.totalorder %s21, 1
        %s226 = scalar_select %p225, %s21, 1
        %s227 = smul.addr %s224, 2
        %s228 = sadd.s32 %s226, %s227
        %s229 = smul.addr %s228, 2
        %s230 = scalar_lea.vmem %s0, %s229
        %p231 = pneg %p51
        %p232 = pneg %p48
        %s233 = sadd.s32 %s21, 1
        %p234 = scmp.lt.s32.totalorder %s20, 1
        %s235 = scalar_select %p234, %s20, 1
        %p236 = scmp.lt.s32.totalorder %s233, 1
        %s237 = scalar_select %p236, %s233, 1
        %s238 = smul.addr %s235, 2
        %s239 = sadd.s32 %s237, %s238
        %s240 = smul.addr %s239, 2
        %s241 = scalar_lea.vmem %s1, %s240
        %p242 = pneg %p81
        %p243 = pneg %p78
        %p244 = pneg %p102
        %p245 = pneg %p99
        %p246 = pneg %p123
        %p247 = pneg %p120
        %p248 = pneg %p151
        %p249 = pneg %p148
        %p250 = scmp.lt.s32.totalorder %s20, 1
        %s251 = scalar_select %p250, %s20, 1
        %p252 = scmp.lt.s32.totalorder %s21, 0
        %s253 = scalar_select %p252, %s21, 0
        %s254 = sadd.s32 %s253, %s251
        %s255 = smul.addr %s254, 4
        %s256 = scalar_lea.vmem %s4, %s255
        %p257 = scmp.lt.s32.totalorder %s20, 1
        %s258 = scalar_select %p257, %s20, 1
        %p259 = scmp.lt.s32.totalorder %s21, 1
        %s260 = scalar_select %p259, %s21, 1
        %s261 = smul.addr %s258, 2
        %s262 = sadd.s32 %s260, %s261
        %s263 = smul.addr %s262, 2
        %s264 = scalar_lea.vmem %s0, %s263
        %s265 = sadd.s32 %s21, 1
        %p266 = scmp.lt.s32.totalorder %s20, 1
        %s267 = scalar_select %p266, %s20, 1
        %p268 = scmp.lt.s32.totalorder %s265, 1
        %s269 = scalar_select %p268, %s265, 1
        %s270 = smul.addr %s267, 2
        %s271 = sadd.s32 %s269, %s270
        %s272 = smul.addr %s271, 2
        %s273 = scalar_lea.vmem %s1, %s272
        %s274 = sadd.s32 %s21, 1
        %p275 = scmp.lt.s32.totalorder %s20, 1
        %s276 = scalar_select %p275, %s20, 1
        %p277 = scmp.lt.s32.totalorder %s21, 0
        %s278 = scalar_select %p277, %s21, 0
        %s279 = sadd.s32 %s278, %s276
        %s280 = smul.addr %s279, 4
        %s281 = scalar_lea.vmem %s4, %s280
        %v283 = vld [vmem:[%s264] sm:$0x3]
        %v284 = vld [vmem:[%s273] sm:$0x3]
        %v285 = vld [vmem:[#allocation2] sm:$0xf]
        %s286 = scalar_lea.vmem [#allocation2], 4
        %v287 = vld [vmem:[%s286] sm:$0xf]
        %290 = vrot.lane.b32.xlu0 %v283, 127
        %v291 = vpop.permute.xlu0 %290
        %292 = vrot.lane.b32.xlu0 %v284, 127
        %v293 = vpop.permute.xlu0 %292
        %vm294 = vcmask 1039360
        %v295 = vsel %vm294, %v291, %v293
        %vm296 = vcmask 31744
        %v298 = vsel %vm296, %v287, 0
        %vm300 = vcmask 1041408
        %v302 = vsel %vm300, %v295, 0
        %304 = vmatpush.bf16.msra.mxu0 0
        %305 = vmatpush.bf16.msra.mxu0 0
        %306 = vmatpush.bf16.msra.mxu0 0
        %307 = vmatpush.bf16.msra.mxu0 0
        %308 = vmatpush.bf16.msra.mxu0 0
        %309 = vmatpush.bf16.msra.mxu0 0
        %310 = vmatpush.bf16.msra.mxu0 0
        %311 = vmatpush.bf16.msra.mxu0 %v302
        %312 = vmatmul.bf16.gmra.mxu0 %v298
        %v313 = vpop.f32.mrf.mxu0
        %v314 = vadd.f32 0.0, %v313
        %v315 = vpop.f32.mrf.mxu0
        %316 = vdwg.mxu0
        %v318 = vsel %vm296, %v285, 0
        %v321 = vsel %vm300, %v283, 0
        %323 = vmatpush.bf16.msra.mxu0 0
        %324 = vmatpush.bf16.msra.mxu0 0
        %325 = vmatpush.bf16.msra.mxu0 0
        %326 = vmatpush.bf16.msra.mxu0 0
        %327 = vmatpush.bf16.msra.mxu0 0
        %328 = vmatpush.bf16.msra.mxu0 0
        %329 = vmatpush.bf16.msra.mxu0 0
        %330 = vmatpush.bf16.msra.mxu0 %v321
        %331 = vmatmul.bf16.gmra.mxu0 %v318
        %v332 = vpop.f32.mrf.mxu0
        %v333 = vadd.f32 %v314, %v332
        %v334 = vpop.f32.mrf.mxu0
        %335 = vdwg.mxu0
        %s336 = scalar_lea.vmem [#allocation2], 8
        %v337 = vld [vmem:[%s336] sm:$0xf]
        %338 = vrot.lane.b32.xlu0 %v283, 126
        %v339 = vpop.permute.xlu0 %338
        %340 = vrot.lane.b32.xlu0 %v284, 126
        %v341 = vpop.permute.xlu0 %340
        %vm342 = vcmask 1031168
        %v343 = vsel %vm342, %v339, %v341
        %v345 = vsel %vm296, %v337, 0
        %v348 = vsel %vm300, %v343, 0
        %350 = vmatpush.bf16.msra.mxu0 0
        %351 = vmatpush.bf16.msra.mxu0 0
        %352 = vmatpush.bf16.msra.mxu0 0
        %353 = vmatpush.bf16.msra.mxu0 0
        %354 = vmatpush.bf16.msra.mxu0 0
        %355 = vmatpush.bf16.msra.mxu0 0
        %356 = vmatpush.bf16.msra.mxu0 0
        %357 = vmatpush.bf16.msra.mxu0 %v348
        %358 = vmatmul.bf16.gmra.mxu0 %v345
        %v359 = vpop.f32.mrf.mxu0
        %v360 = vadd.f32 0.0, %v359
        %v361 = vpop.f32.mrf.mxu0
        %362 = vdwg.mxu0
        %v363 = vadd.f32 %v333, %v360
        %s364 = scalar_lea.vmem [#allocation2], 12
        %v365 = vld [vmem:[%s364] sm:$0xf]
        %366 = vrot.lane.b32.xlu0 %v283, 125
        %v367 = vpop.permute.xlu0 %366
        %368 = vrot.lane.b32.xlu0 %v284, 125
        %v369 = vpop.permute.xlu0 %368
        %vm370 = vcmask 1022976
        %v371 = vsel %vm370, %v367, %v369
        %v373 = vsel %vm296, %v365, 0
        %v376 = vsel %vm300, %v371, 0
        %378 = vmatpush.bf16.msra.mxu0 0
        %379 = vmatpush.bf16.msra.mxu0 0
        %380 = vmatpush.bf16.msra.mxu0 0
        %381 = vmatpush.bf16.msra.mxu0 0
        %382 = vmatpush.bf16.msra.mxu0 0
        %383 = vmatpush.bf16.msra.mxu0 0
        %384 = vmatpush.bf16.msra.mxu0 0
        %385 = vmatpush.bf16.msra.mxu0 %v376
        %386 = vmatmul.bf16.gmra.mxu0 %v373
        %v387 = vpop.f32.mrf.mxu0
        %v388 = vadd.f32 0.0, %v387
        %v389 = vpop.f32.mrf.mxu0
        %390 = vdwg.mxu0
        %v391 = vadd.f32 %v363, %v388
        %s392 = scalar_lea.vmem [#allocation2], 16
        %v393 = vld [vmem:[%s392] sm:$0xf]
        %394 = vrot.lane.b32.xlu0 %v283, 124
        %v395 = vpop.permute.xlu0 %394
        %396 = vrot.lane.b32.xlu0 %v284, 124
        %v397 = vpop.permute.xlu0 %396
        %vm398 = vcmask 1014784
        %v399 = vsel %vm398, %v395, %v397
        %v401 = vsel %vm296, %v393, 0
        %v404 = vsel %vm300, %v399, 0
        %406 = vmatpush.bf16.msra.mxu0 0
        %407 = vmatpush.bf16.msra.mxu0 0
        %408 = vmatpush.bf16.msra.mxu0 0
        %409 = vmatpush.bf16.msra.mxu0 0
        %410 = vmatpush.bf16.msra.mxu0 0
        %411 = vmatpush.bf16.msra.mxu0 0
        %412 = vmatpush.bf16.msra.mxu0 0
        %413 = vmatpush.bf16.msra.mxu0 %v404
        %414 = vmatmul.bf16.gmra.mxu0 %v401
        %v415 = vpop.f32.mrf.mxu0
        %v416 = vadd.f32 0.0, %v415
        %v417 = vpop.f32.mrf.mxu0
        %418 = vdwg.mxu0
        %v419 = vadd.f32 %v391, %v416
        %s420 = scalar_lea.vmem [#allocation2], 20
        %v421 = vld [vmem:[%s420] sm:$0xf]
        %422 = vrot.lane.b32.xlu0 %v283, 123
        %v423 = vpop.permute.xlu0 %422
        %424 = vrot.lane.b32.xlu0 %v284, 123
        %v425 = vpop.permute.xlu0 %424
        %vm426 = vcmask 1006592
        %v427 = vsel %vm426, %v423, %v425
        %v429 = vsel %vm296, %v421, 0
        %v432 = vsel %vm300, %v427, 0
        %434 = vmatpush.bf16.msra.mxu0 0
        %435 = vmatpush.bf16.msra.mxu0 0
        %436 = vmatpush.bf16.msra.mxu0 0
        %437 = vmatpush.bf16.msra.mxu0 0
        %438 = vmatpush.bf16.msra.mxu0 0
        %439 = vmatpush.bf16.msra.mxu0 0
        %440 = vmatpush.bf16.msra.mxu0 0
        %441 = vmatpush.bf16.msra.mxu0 %v432
        %442 = vmatmul.bf16.gmra.mxu0 %v429
        %v443 = vpop.f32.mrf.mxu0
        %v444 = vadd.f32 0.0, %v443
        %v445 = vpop.f32.mrf.mxu0
        %446 = vdwg.mxu0
        %v447 = vadd.f32 %v419, %v444
        %s448 = scalar_lea.vmem [#allocation2], 24
        %v449 = vld [vmem:[%s448] sm:$0xf]
        %450 = vrot.lane.b32.xlu0 %v283, 122
        %v451 = vpop.permute.xlu0 %450
        %452 = vrot.lane.b32.xlu0 %v284, 122
        %v453 = vpop.permute.xlu0 %452
        %vm454 = vcmask 998400
        %v455 = vsel %vm454, %v451, %v453
        %v457 = vsel %vm296, %v449, 0
        %v460 = vsel %vm300, %v455, 0
        %462 = vmatpush.bf16.msra.mxu0 0
        %463 = vmatpush.bf16.msra.mxu0 0
        %464 = vmatpush.bf16.msra.mxu0 0
        %465 = vmatpush.bf16.msra.mxu0 0
        %466 = vmatpush.bf16.msra.mxu0 0
        %467 = vmatpush.bf16.msra.mxu0 0
        %468 = vmatpush.bf16.msra.mxu0 0
        %469 = vmatpush.bf16.msra.mxu0 %v460
        %470 = vmatmul.bf16.gmra.mxu0 %v457
        %v471 = vpop.f32.mrf.mxu0
        %v472 = vadd.f32 0.0, %v471
        %v473 = vpop.f32.mrf.mxu0
        %474 = vdwg.mxu0
        %v475 = vadd.f32 %v447, %v472
        %s476 = scalar_lea.vmem [#allocation2], 28
        %v477 = vld [vmem:[%s476] sm:$0xf]
        %478 = vrot.lane.b32.xlu0 %v283, 121
        %v479 = vpop.permute.xlu0 %478
        %480 = vrot.lane.b32.xlu0 %v284, 121
        %v481 = vpop.permute.xlu0 %480
        %vm482 = vcmask 990208
        %v483 = vsel %vm482, %v479, %v481
        %v485 = vsel %vm296, %v477, 0
        %v488 = vsel %vm300, %v483, 0
        %490 = vmatpush.bf16.msra.mxu0 0
        %491 = vmatpush.bf16.msra.mxu0 0
        %492 = vmatpush.bf16.msra.mxu0 0
        %493 = vmatpush.bf16.msra.mxu0 0
        %494 = vmatpush.bf16.msra.mxu0 0
        %495 = vmatpush.bf16.msra.mxu0 0
        %496 = vmatpush.bf16.msra.mxu0 0
        %497 = vmatpush.bf16.msra.mxu0 %v488
        %498 = vmatmul.bf16.gmra.mxu0 %v485
        %v499 = vpop.f32.mrf.mxu0
        %v500 = vadd.f32 0.0, %v499
        %v501 = vpop.f32.mrf.mxu0
        %502 = vdwg.mxu0
        %v503 = vadd.f32 %v475, %v500
        %s504 = scalar_lea.vmem [#allocation2], 32
        %v505 = vld [vmem:[%s504] sm:$0xf]
        %506 = vrot.lane.b32.xlu0 %v283, 120
        %v507 = vpop.permute.xlu0 %506
        %508 = vrot.lane.b32.xlu0 %v284, 120
        %v509 = vpop.permute.xlu0 %508
        %vm510 = vcmask 982016
        %v511 = vsel %vm510, %v507, %v509
        %v513 = vsel %vm296, %v505, 0
        %v516 = vsel %vm300, %v511, 0
        %518 = vmatpush.bf16.msra.mxu0 0
        %519 = vmatpush.bf16.msra.mxu0 0
        %520 = vmatpush.bf16.msra.mxu0 0
        %521 = vmatpush.bf16.msra.mxu0 0
        %522 = vmatpush.bf16.msra.mxu0 0
        %523 = vmatpush.bf16.msra.mxu0 0
        %524 = vmatpush.bf16.msra.mxu0 0
        %525 = vmatpush.bf16.msra.mxu0 %v516
        %526 = vmatmul.bf16.gmra.mxu0 %v513
        %v527 = vpop.f32.mrf.mxu0
        %v528 = vadd.f32 0.0, %v527
        %v529 = vpop.f32.mrf.mxu0
        %530 = vdwg.mxu0
        %v531 = vadd.f32 %v503, %v528
        %v532 = vld [vmem:[%s3] sm:$0xff]
        %534 = vset.pattern.permute.xlu0 0
        %535 = vperm.xlu0 %534, %v532
        %v536 = vpop.permute.xlu0 %535
        %v538 = vadd.f32 %v531, %v536
        %vm539 = vcmp.ge.f32.partialorder %v538, 0.0
        %v540 = vmul.f32 %v538, 0.2
        %v541 = vsel %vm539, %v538, %v540
        %v542 = vpack.c.bf16 %v541, %v541
        %543 = vst [vmem:[%s281] sm:$0xf] %v542
        %p544 = scmp.lt.s32.totalorder %s20, 1
        %s545 = scalar_select %p544, %s20, 1
        %p546 = scmp.lt.s32.totalorder %s21, 0
        %s547 = scalar_select %p546, %s21, 0
        %s548 = sadd.s32 %s547, %s545
        %s549 = smul.addr %s548, 4
        %s550 = scalar_lea.vmem %s4, %s549
        // Predicated region
        $region41: #{_lambda_.3} parent=35 // pred_check
          %p551 = pneg %p148
        $region42: #{_lambda_.3} parent=35 // pred_check_branch
          %553 = sbr.rel (%p551) target = $region44
        $region43: #{_lambda_.3} parent=35 // pred_region
          _
        $region44: #{_lambda_.3} parent=35 // pred_fallthru
          _
      $region36: #{_lambda_.3} parent=5 // pred_fallthru
        _
      %p554 = scmp.le.s32.totalorder 2, %s11
      // Predicated region
      $region45: #{_lambda_.3} parent=5 // pred_check
        %p555 = pneg %p554
      $region46: #{_lambda_.3} parent=5 // pred_check_branch
        %557 = sbr.rel (%p555) target = $region48
      $region47: #{_lambda_.3} parent=5 // pred_region
        %s558 = ssub.s32 %s11, 2
        // Predicated region
        $region49: #{_lambda_.3} parent=47 // pred_check
          %p559 = pneg %p154
        $region50: #{_lambda_.3} parent=47 // pred_check_branch
          %561 = sbr.rel (%p559) target = $region52
        $region51: #{_lambda_.3} parent=47 // pred_region
          %p562 = scmp.lt.s32.totalorder %s22, 1
          %s563 = scalar_select %p562, %s22, 1
          %p564 = scmp.lt.s32.totalorder %s23, 0
          %s565 = scalar_select %p564, %s23, 0
          %s566 = sadd.s32 %s565, %s563
          %s567 = smul.addr %s566, 4
          %s568 = scalar_lea.vmem %s4, %s567
        $region52: #{_lambda_.3} parent=47 // pred_fallthru
          _
      $region48: #{_lambda_.3} parent=5 // pred_fallthru
        _
    $region6: #{_lambda_.3} parent=1 // loop_footer
      %s15 = sadd.s32 1, %s11
    $region7: #{_lambda_.3} parent=1 // loop_footer_branch
      %10 = sbr.rel target = $region3
    $region8: #{_lambda_.3} parent=1 // loop_exit
      _
    %569 = vsyncpa [#allocation3], 1
    %s570 = scalar_lea.sflag [#allocation3], 1
    %571 = vsyncpa %s570, 1

// kernel: _lambda_.4
$region0: #{_lambda_.4}
  #allocation0 [shape = 'u32[]', space=smem, size = 0x4, offset = 0x4, fixed_abs, tag = 'smem constant byte address 0x4 - core index']
  #allocation1 [shape = 'u32[72,128]{1,0:T(1,128)}', space=vmem, size = 0x9000, scoped, tag = 'internal scratch']
  %s0 = inlined_call_operand.vmem [shape: bf16[2,32,256], index: 0, kind: input, shape index: {}, may-alias: {0,1}]
  %s1 = inlined_call_operand.vmem [shape: bf16[2,32,256], index: 1, kind: input, shape index: {}, may-alias: {0,1}]
  %s2 = inlined_call_operand.vmem [shape: bf16[6,16,32], index: 2, kind: input, shape index: {}]
  %s3 = inlined_call_operand.vmem [shape: f32[16,1], index: 3, kind: input, shape index: {}]
  %s4 = inlined_call_operand.vmem [shape: bf16[2,16,128], index: 4, kind: output, shape index: {}]
  %s5 = sld [smem:[#allocation0]]
  $region131: #{_lambda_.4} parent=0
    _
  %s7 = ssub.s32 1, %s5
  %s8 = scalar_select 0, %s7, %s5
  $region1: #{_lambda_.4} parent=0
    #allocation2 [shape = 'u8[16384]{0}', space=vmem, size = 0x4000, scoped, tag = 'input window, operand 0']
    #allocation3 [shape = 'u8[16384]{0}', space=vmem, size = 0x4000, scoped, tag = 'input window, operand 1']
    loop: start=0, step=1, limit=4
    $region2: #{_lambda_.4} parent=1 // loop_pre_header
      _
    $region3: #{_lambda_.4} parent=1 // loop_header
      %s10 = sphi 0, %s14
      %p11 = scmp.ge.s32.totalorder %s10, 4
      %s17 = sphi 0, %s29
      %s18 = sphi 0, %s25
      %s19 = sphi 0, %s17
      %s20 = sphi 0, %s18
      %s21 = sphi 0, %s19
      %s22 = sphi 0, %s20
      %s34 = sphi 0, %s36
      %s37 = sphi 0, %s34
      %s38 = sphi 0, %s37
      %s54 = sphi 0, %s38
      %s64 = sphi 0, %s66
      %s67 = sphi 0, %s64
      %s68 = sphi 0, %s67
      %s84 = sphi 0, %s68
      %s88 = sphi 0, %s88
      %s90 = sphi 0, %s88
      %s91 = sphi 0, %s90
      %s105 = sphi 0, %s91
      %s109 = sphi 0, %s109
      %s111 = sphi 0, %s109
      %s112 = sphi 0, %s111
      %s126 = sphi 0, %s112
      %s134 = sphi 0, %s136
      %s137 = sphi 0, %s134
      %s138 = sphi 0, %s137
      %s154 = sphi 0, %s138
    $region4: #{_lambda_.4} parent=1 // loop_header_branch
      %13 = sbr.rel (%p11) target = $region8
    $region5: #{_lambda_.4} parent=1 // loop_body
      %s15 = ssub.s32 %s10, 1
      %s16 = ssub.s32 %s10, 2
      %s23 = sadd.s32 1, %s18
      %p24 = scmp.ge.s32.totalorder %s23, 1
      %s25 = scalar_select %p24, 0, %s23
      %s26 = sadd.s32 1, %s17
      %s27 = scalar_select %p24, %s26, %s17
      %p28 = scmp.ge.s32.totalorder %s27, 2
      %s29 = scalar_select %p28, 0, %s27
      %s30 = ssub.s32 %s17, %s29
      %s31 = ssub.s32 %s18, %s25
      %s32 = sor.u32 %s30, %s31
      %p33 = scmp.eq.s32.totalorder %s32, 0
      %s35 = sadd.s32 %s34, 1
      %s36 = scalar_select %p33, %s34, %s35
      %p39 = pneg %p33
      %p40 = scmp.eq.s32.totalorder %s10, 1
      %p41 = por %p39, %p40
      %p42 = scmp.ne.s32.totalorder %s34, %s37
      %p43 = scmp.eq.s32.totalorder %s10, 0
      %p44 = por %p42, %p43
      %p45 = scmp.ne.s32.totalorder %s34, %s37
      %p46 = scmp.eq.s32.totalorder %s15, 1
      %p47 = por %p45, %p46
      %p48 = scmp.ne.s32.totalorder %s37, %s38
      %p49 = scmp.eq.s32.totalorder %s15, 0
      %p50 = por %p48, %p49
      %p51 = scmp.ne.s32.totalorder %s37, %s38
      %p52 = scmp.eq.s32.totalorder %s16, 1
      %p53 = por %p51, %p52
      %p55 = scmp.ne.s32.totalorder %s38, %s54
      %p56 = scmp.eq.s32.totalorder %s16, 0
      %p57 = por %p55, %p56
      %s58 = sadd.s32 %s18, 1
      %s59 = sadd.s32 %s25, 1
      %s60 = ssub.s32 %s17, %s29
      %s61 = ssub.s32 %s58, %s59
      %s62 = sor.u32 %s60, %s61
      %p63 = scmp.eq.s32.totalorder %s62, 0
      %s65 = sadd.s32 %s64, 1
      %s66 = scalar_select %p63, %s64, %s65
      %p69 = pneg %p63
      %p70 = scmp.eq.s32.totalorder %s10, 1
      %p71 = por %p69, %p70
      %p72 = scmp.ne.s32.totalorder %s64, %s67
      %p73 = scmp.eq.s32.totalorder %s10, 0
      %p74 = por %p72, %p73
      %p75 = scmp.ne.s32.totalorder %s64, %s67
      %p76 = scmp.eq.s32.totalorder %s15, 1
      %p77 = por %p75, %p76
      %p78 = scmp.ne.s32.totalorder %s67, %s68
      %p79 = scmp.eq.s32.totalorder %s15, 0
      %p80 = por %p78, %p79
      %p81 = scmp.ne.s32.totalorder %s67, %s68
      %p82 = scmp.eq.s32.totalorder %s16, 1
      %p83 = por %p81, %p82
      %p85 = scmp.ne.s32.totalorder %s68, %s84
      %p86 = scmp.eq.s32.totalorder %s16, 0
      %p87 = por %p85, %p86
      %s89 = sadd.s32 %s88, 1
      %p92 = scmp.eq.s32.totalorder %s10, 1
      %p93 = scmp.ne.s32.totalorder %s88, %s90
      %p94 = scmp.eq.s32.totalorder %s10, 0
      %p95 = por %p93, %p94
      %p96 = scmp.ne.s32.totalorder %s88, %s90
      %p97 = scmp.eq.s32.totalorder %s15, 1
      %p98 = por %p96, %p97
      %p99 = scmp.ne.s32.totalorder %s90, %s91
      %p100 = scmp.eq.s32.totalorder %s15, 0
      %p101 = por %p99, %p100
      %p102 = scmp.ne.s32.totalorder %s90, %s91
      %p103 = scmp.eq.s32.totalorder %s16, 1
      %p104 = por %p102, %p103
      %p106 = scmp.ne.s32.totalorder %s91, %s105
      %p107 = scmp.eq.s32.totalorder %s16, 0
      %p108 = por %p106, %p107
      %s110 = sadd.s32 %s109, 1
      %p113 = scmp.eq.s32.totalorder %s10, 1
      %p114 = scmp.ne.s32.totalorder %s109, %s111
      %p115 = scmp.eq.s32.totalorder %s10, 0
      %p116 = por %p114, %p115
      %p117 = scmp.ne.s32.totalorder %s109, %s111
      %p118 = scmp.eq.s32.totalorder %s15, 1
      %p119 = por %p117, %p118
      %p120 = scmp.ne.s32.totalorder %s111, %s112
      %p121 = scmp.eq.s32.totalorder %s15, 0
      %p122 = por %p120, %p121
      %p123 = scmp.ne.s32.totalorder %s111, %s112
      %p124 = scmp.eq.s32.totalorder %s16, 1
      %p125 = por %p123, %p124
      %p127 = scmp.ne.s32.totalorder %s112, %s126
      %p128 = scmp.eq.s32.totalorder %s16, 0
      %p129 = por %p127, %p128
      %s130 = ssub.s32 %s17, %s29
      %s131 = ssub.s32 %s18, %s25
      %s132 = sor.u32 %s130, %s131
      %p133 = scmp.eq.s32.totalorder %s132, 0
      %s135 = sadd.s32 %s134, 1
      %s136 = scalar_select %p133, %s134, %s135
      %p139 = pneg %p133
      %p140 = scmp.eq.s32.totalorder %s10, 1
      %p141 = por %p139, %p140
      %p142 = scmp.ne.s32.totalorder %s134, %s137
      %p143 = scmp.eq.s32.totalorder %s10, 0
      %p144 = por %p142, %p143
      %p145 = scmp.ne.s32.totalorder %s134, %s137
      %p146 = scmp.eq.s32.totalorder %s15, 1
      %p147 = por %p145, %p146
      %p148 = scmp.ne.s32.totalorder %s137, %s138
      %p149 = scmp.eq.s32.totalorder %s15, 0
      %p150 = por %p148, %p149
      %p151 = scmp.ne.s32.totalorder %s137, %s138
      %p152 = scmp.eq.s32.totalorder %s16, 1
      %p153 = por %p151, %p152
      %p155 = scmp.ne.s32.totalorder %s138, %s154
      %p156 = scmp.eq.s32.totalorder %s16, 0
      %p157 = por %p155, %p156
      %p158 = scmp.le.s32.totalorder 1, %s10
      %p159 = scmp.lt.s32.totalorder %s10, 3
      %p160 = pnand %p158, %p159
      %p161 = pneg %p160
      // Predicated region
      $region9: #{_lambda_.4} parent=5 // pred_check
        _
      $region10: #{_lambda_.4} parent=5 // pred_check_branch
        %163 = sbr.rel (%p160) target = $region12
      $region11: #{_lambda_.4} parent=5 // pred_region
        %s164 = ssub.s32 %s10, 1
        // Predicated region
        $region13: #{_lambda_.4} parent=11 // pred_check
          %p165 = pneg %p101
        $region14: #{_lambda_.4} parent=11 // pred_check_branch
          %167 = sbr.rel (%p165) target = $region16
        $region15: #{_lambda_.4} parent=11 // pred_region
          _
        $region16: #{_lambda_.4} parent=11 // pred_fallthru
          _
        // Predicated region
        $region17: #{_lambda_.4} parent=11 // pred_check
          %p168 = pneg %p122
        $region18: #{_lambda_.4} parent=11 // pred_check_branch
          %170 = sbr.rel (%p168) target = $region20
        $region19: #{_lambda_.4} parent=11 // pred_region
          _
        $region20: #{_lambda_.4} parent=11 // pred_fallthru
          _
      $region12: #{_lambda_.4} parent=5 // pred_fallthru
        _
      %p171 = scmp.lt.s32.totalorder %s10, 2
      // Predicated region
      $region21: #{_lambda_.4} parent=5 // pred_check
        %p172 = pneg %p171
      $region22: #{_lambda_.4} parent=5 // pred_check_branch
        %174 = sbr.rel (%p172) target = $region24
      $region23: #{_lambda_.4} parent=5 // pred_region
        // Predicated region
        $region25: #{_lambda_.4} parent=23 // pred_check
          %p175 = pneg %p44
        $region26: #{_lambda_.4} parent=23 // pred_check_branch
          %177 = sbr.rel (%p175) target = $region28
        $region27: #{_lambda_.4} parent=23 // pred_region
          %s178 = sand.u32 %s34, 1
          %s179 = sand.u32 %s34, 1
          %s180 = smul.addr %s179, 16
          %s181 = scalar_lea.vmem [#allocation2], %s180
          %s182 = smul.addr %s17, 8
          %s183 = sadd.s32 %s18, %s182
          %s184 = smul.addr %s183, 4
          %s185 = scalar_lea.vmem %s0, %s184
          // Predicated region
          $region29: #{_lambda_.4} parent=27 // pred_check
            _
          $region30: #{_lambda_.4} parent=27 // pred_check_branch
            %187 = sbr.rel (0) target = $region32
          $region31: #{_lambda_.4} parent=27 // pred_region
            // Predicated region
            $region33: #{_lambda_.4} parent=31 // pred_check
              _
            $region34: #{_lambda_.4} parent=31 // pred_check_branch
              %189 = sbr.rel target = $region36
            $region35: #{_lambda_.4} parent=31 // pred_region
              // Predicated region
              $region48: #{_lambda_.4} parent=35 // pred_check
                _
              $region49: #{_lambda_.4} parent=35 // pred_check_branch
                %211 = sbr.rel (0) target = $region51
              $region50: #{_lambda_.4} parent=35 // pred_region
                loop: start=0, step=1, limit=1
                $region52: #{_lambda_.4} parent=50 // loop_pre_header
                  _
                $region53: #{_lambda_.4} parent=50 // loop_header
                  %s213 = sphi 0, %s217
                  %p214 = scmp.ge.s32.totalorder %s213, 1
                  %s218 = sphi %s185, %s185
                  %s219 = sphi %s181, %s181
                $region54: #{_lambda_.4} parent=50 // loop_header_branch
                  %216 = sbr.rel (%p214) target = $region58
                $region55: #{_lambda_.4} parent=50 // loop_body
                  _
                $region56: #{_lambda_.4} parent=50 // loop_footer
                  %s217 = sadd.s32 1, %s213
                $region57: #{_lambda_.4} parent=50 // loop_footer_branch
                  %212 = sbr.rel target = $region53
                $region58: #{_lambda_.4} parent=50 // loop_exit
                  _
                %s221 = ssub.s32 16, 1
                loop: start=0, step=1, limit=1
                $region59: #{_lambda_.4} parent=50 // loop_pre_header
                  _
                $region60: #{_lambda_.4} parent=50 // loop_header
                  %s223 = sphi 0, %s227
                  %p224 = scmp.ge.s32.totalorder %s223, 1
                  %s228 = sphi %s185, %s185
                  %s229 = sphi %s181, %s181
                $region61: #{_lambda_.4} parent=50 // loop_header_branch
                  %226 = sbr.rel (%p224) target = $region65
                $region62: #{_lambda_.4} parent=50 // loop_body
                  %v230 = vld [vmem:[%s228] sm:%s221]
                  %231 = vst [vmem:[%s229] sm:%s221] %v230
                  %v232 = vld [vmem:[%s228 + $0x8] sm:%s221]
                  %233 = vst [vmem:[%s229 + $0x4] sm:%s221] %v232
                  %v234 = vld [vmem:[%s228 + $0x10] sm:%s221]
                  %235 = vst [vmem:[%s229 + $0x8] sm:%s221] %v234
                  %v236 = vld [vmem:[%s228 + $0x18] sm:%s221]
                  %237 = vst [vmem:[%s229 + $0xc] sm:%s221] %v236
                $region63: #{_lambda_.4} parent=50 // loop_footer
                  %s227 = sadd.s32 1, %s223
                $region64: #{_lambda_.4} parent=50 // loop_footer_branch
                  %222 = sbr.rel target = $region60
                $region65: #{_lambda_.4} parent=50 // loop_exit
                  _
              $region51: #{_lambda_.4} parent=35 // pred_fallthru
                _
            $region36: #{_lambda_.4} parent=31 // pred_fallthru
              _
            // Predicated region
            $region37: #{_lambda_.4} parent=31 // pred_check
              _
            $region38: #{_lambda_.4} parent=31 // pred_check_branch
              %191 = sbr.rel (0) target = $region40
            $region39: #{_lambda_.4} parent=31 // pred_region
              %s193 = ssub.s32 16, 1
              loop: start=0, step=1, limit=1
              $region41: #{_lambda_.4} parent=39 // loop_pre_header
                _
              $region42: #{_lambda_.4} parent=39 // loop_header
                %s195 = sphi 0, %s199
                %p196 = scmp.ge.s32.totalorder %s195, 1
                %s200 = sphi %s185, %s185
                %s201 = sphi %s181, %s181
              $region43: #{_lambda_.4} parent=39 // loop_header_branch
                %198 = sbr.rel (%p196) target = $region47
              $region44: #{_lambda_.4} parent=39 // loop_body
                %v202 = vld [vmem:[%s200] sm:%s193]
                %203 = vst [vmem:[%s201] sm:%s193] %v202
                %v204 = vld [vmem:[%s200 + $0x8] sm:%s193]
                %205 = vst [vmem:[%s201 + $0x4] sm:%s193] %v204
                %v206 = vld [vmem:[%s200 + $0x10] sm:%s193]
                %207 = vst [vmem:[%s201 + $0x8] sm:%s193] %v206
                %v208 = vld [vmem:[%s200 + $0x18] sm:%s193]
                %209 = vst [vmem:[%s201 + $0xc] sm:%s193] %v208
              $region45: #{_lambda_.4} parent=39 // loop_footer
                %s199 = sadd.s32 1, %s195
              $region46: #{_lambda_.4} parent=39 // loop_footer_branch
                %194 = sbr.rel target = $region42
              $region47: #{_lambda_.4} parent=39 // loop_exit
                _
            $region40: #{_lambda_.4} parent=31 // pred_fallthru
              _
          $region32: #{_lambda_.4} parent=27 // pred_fallthru
            _
          %238 = vnop
        $region28: #{_lambda_.4} parent=23 // pred_fallthru
          _
        // Predicated region
        $region66: #{_lambda_.4} parent=23 // pred_check
          %p239 = pneg %p74
        $region67: #{_lambda_.4} parent=23 // pred_check_branch
          %241 = sbr.rel (%p239) target = $region69
        $region68: #{_lambda_.4} parent=23 // pred_region
          %s242 = sand.u32 %s64, 1
          %s243 = sand.u32 %s64, 1
          %s244 = smul.addr %s243, 16
          %s245 = scalar_lea.vmem [#allocation3], %s244
          %s246 = sadd.s32 %s18, 1
          %s247 = smul.addr %s17, 8
          %s248 = sadd.s32 %s246, %s247
          %s249 = smul.addr %s248, 4
          %s250 = scalar_lea.vmem %s1, %s249
          // Predicated region
          $region70: #{_lambda_.4} parent=68 // pred_check
            _
          $region71: #{_lambda_.4} parent=68 // pred_check_branch
            %252 = sbr.rel (0) target = $region73
          $region72: #{_lambda_.4} parent=68 // pred_region
            // Predicated region
            $region74: #{_lambda_.4} parent=72 // pred_check
              _
            $region75: #{_lambda_.4} parent=72 // pred_check_branch
              %254 = sbr.rel target = $region77
            $region76: #{_lambda_.4} parent=72 // pred_region
              // Predicated region
              $region89: #{_lambda_.4} parent=76 // pred_check
                _
              $region90: #{_lambda_.4} parent=76 // pred_check_branch
                %276 = sbr.rel (0) target = $region92
              $region91: #{_lambda_.4} parent=76 // pred_region
                loop: start=0, step=1, limit=1
                $region93: #{_lambda_.4} parent=91 // loop_pre_header
                  _
                $region94: #{_lambda_.4} parent=91 // loop_header
                  %s278 = sphi 0, %s282
                  %p279 = scmp.ge.s32.totalorder %s278, 1
                  %s283 = sphi %s250, %s250
                  %s284 = sphi %s245, %s245
                $region95: #{_lambda_.4} parent=91 // loop_header_branch
                  %281 = sbr.rel (%p279) target = $region99
                $region96: #{_lambda_.4} parent=91 // loop_body
                  _
                $region97: #{_lambda_.4} parent=91 // loop_footer
                  %s282 = sadd.s32 1, %s278
                $region98: #{_lambda_.4} parent=91 // loop_footer_branch
                  %277 = sbr.rel target = $region94
                $region99: #{_lambda_.4} parent=91 // loop_exit
                  _
                %s286 = ssub.s32 16, 1
                loop: start=0, step=1, limit=1
                $region100: #{_lambda_.4} parent=91 // loop_pre_header
                  _
                $region101: #{_lambda_.4} parent=91 // loop_header
                  %s288 = sphi 0, %s292
                  %p289 = scmp.ge.s32.totalorder %s288, 1
                  %s293 = sphi %s250, %s250
                  %s294 = sphi %s245, %s245
                $region102: #{_lambda_.4} parent=91 // loop_header_branch
                  %291 = sbr.rel (%p289) target = $region106
                $region103: #{_lambda_.4} parent=91 // loop_body
                  %v295 = vld [vmem:[%s293] sm:%s286]
                  %296 = vst [vmem:[%s294] sm:%s286] %v295
                  %v297 = vld [vmem:[%s293 + $0x8] sm:%s286]
                  %298 = vst [vmem:[%s294 + $0x4] sm:%s286] %v297
                  %v299 = vld [vmem:[%s293 + $0x10] sm:%s286]
                  %300 = vst [vmem:[%s294 + $0x8] sm:%s286] %v299
                  %v301 = vld [vmem:[%s293 + $0x18] sm:%s286]
                  %302 = vst [vmem:[%s294 + $0xc] sm:%s286] %v301
                $region104: #{_lambda_.4} parent=91 // loop_footer
                  %s292 = sadd.s32 1, %s288
                $region105: #{_lambda_.4} parent=91 // loop_footer_branch
                  %287 = sbr.rel target = $region101
                $region106: #{_lambda_.4} parent=91 // loop_exit
                  _
              $region92: #{_lambda_.4} parent=76 // pred_fallthru
                _
            $region77: #{_lambda_.4} parent=72 // pred_fallthru
              _
            // Predicated region
            $region78: #{_lambda_.4} parent=72 // pred_check
              _
            $region79: #{_lambda_.4} parent=72 // pred_check_branch
              %256 = sbr.rel (0) target = $region81
            $region80: #{_lambda_.4} parent=72 // pred_region
              %s258 = ssub.s32 16, 1
              loop: start=0, step=1, limit=1
              $region82: #{_lambda_.4} parent=80 // loop_pre_header
                _
              $region83: #{_lambda_.4} parent=80 // loop_header
                %s260 = sphi 0, %s264
                %p261 = scmp.ge.s32.totalorder %s260, 1
                %s265 = sphi %s250, %s250
                %s266 = sphi %s245, %s245
              $region84: #{_lambda_.4} parent=80 // loop_header_branch
                %263 = sbr.rel (%p261) target = $region88
              $region85: #{_lambda_.4} parent=80 // loop_body
                %v267 = vld [vmem:[%s265] sm:%s258]
                %268 = vst [vmem:[%s266] sm:%s258] %v267
                %v269 = vld [vmem:[%s265 + $0x8] sm:%s258]
                %270 = vst [vmem:[%s266 + $0x4] sm:%s258] %v269
                %v271 = vld [vmem:[%s265 + $0x10] sm:%s258]
                %272 = vst [vmem:[%s266 + $0x8] sm:%s258] %v271
                %v273 = vld [vmem:[%s265 + $0x18] sm:%s258]
                %274 = vst [vmem:[%s266 + $0xc] sm:%s258] %v273
              $region86: #{_lambda_.4} parent=80 // loop_footer
                %s264 = sadd.s32 1, %s260
              $region87: #{_lambda_.4} parent=80 // loop_footer_branch
                %259 = sbr.rel target = $region83
              $region88: #{_lambda_.4} parent=80 // loop_exit
                _
            $region81: #{_lambda_.4} parent=72 // pred_fallthru
              _
          $region73: #{_lambda_.4} parent=68 // pred_fallthru
            _
          %303 = vnop
        $region69: #{_lambda_.4} parent=23 // pred_fallthru
          _
      $region24: #{_lambda_.4} parent=5 // pred_fallthru
        _
      %p304 = scmp.le.s32.totalorder 1, %s10
      %p305 = scmp.lt.s32.totalorder %s10, 3
      %p306 = pnand %p304, %p305
      %p307 = pneg %p306
      // Predicated region
      $region107: #{_lambda_.4} parent=5 // pred_check
        _
      $region108: #{_lambda_.4} parent=5 // pred_check_branch
        %309 = sbr.rel (%p306) target = $region110
      $region109: #{_lambda_.4} parent=5 // pred_region
        %s310 = ssub.s32 %s10, 1
        %s311 = sand.u32 %s37, 1
        %s312 = sand.u32 %s37, 1
        %s313 = smul.addr %s312, 16
        %s314 = scalar_lea.vmem [#allocation2], %s313
        // Predicated region
        $region111: #{_lambda_.4} parent=109 // pred_check
          %p315 = pneg %p50
        $region112: #{_lambda_.4} parent=109 // pred_check_branch
          %317 = sbr.rel (%p315) target = $region114
        $region113: #{_lambda_.4} parent=109 // pred_region
          _
        $region114: #{_lambda_.4} parent=109 // pred_fallthru
          _
        %s318 = sand.u32 %s67, 1
        %s319 = sand.u32 %s67, 1
        %s320 = smul.addr %s319, 16
        %s321 = scalar_lea.vmem [#allocation3], %s320
        // Predicated region
        $region115: #{_lambda_.4} parent=109 // pred_check
          %p322 = pneg %p80
        $region116: #{_lambda_.4} parent=109 // pred_check_branch
          %324 = sbr.rel (%p322) target = $region118
        $region117: #{_lambda_.4} parent=109 // pred_region
          _
        $region118: #{_lambda_.4} parent=109 // pred_fallthru
          _
        %s325 = sand.u32 %s37, 1
        %s326 = sand.u32 %s37, 1
        %s327 = smul.addr %s326, 16
        %s328 = scalar_lea.vmem [#allocation2], %s327
        %p329 = pneg %p50
        %p330 = pneg %p47
        %s331 = sand.u32 %s67, 1
        %s332 = sand.u32 %s67, 1
        %s333 = smul.addr %s332, 16
        %s334 = scalar_lea.vmem [#allocation3], %s333
        %p335 = pneg %p80
        %p336 = pneg %p77
        %p337 = pneg %p101
        %p338 = pneg %p98
        %p339 = pneg %p122
        %p340 = pneg %p119
        %p341 = pneg %p150
        %p342 = pneg %p147
        %p343 = scmp.lt.s32.totalorder %s19, 1
        %s344 = scalar_select %p343, %s19, 1
        %p345 = scmp.lt.s32.totalorder %s20, 0
        %s346 = scalar_select %p345, %s20, 0
        %s347 = smul.addr %s344, 2
        %s348 = sadd.s32 %s346, %s347
        %s349 = smul.addr %s348, 4
        %s350 = scalar_lea.vmem %s4, %s349
        %s351 = sadd.s32 %s20, 1
        %p352 = scmp.lt.s32.totalorder %s19, 1
        %s353 = scalar_select %p352, %s19, 1
        %p354 = scmp.lt.s32.totalorder %s20, 0
        %s355 = scalar_select %p354, %s20, 0
        %s356 = smul.addr %s353, 2
        %s357 = sadd.s32 %s355, %s356
        %s358 = smul.addr %s357, 4
        %s359 = scalar_lea.vmem %s4, %s358
        %v361 = vld [vmem:[%s314] sm:$0xf]
        %v362 = vld [vmem:[%s314 + $0x4] sm:$0xf]
        %v363 = vld [vmem:[%s314 + $0x8] sm:$0xf]
        %v364 = vld [vmem:[%s314 + $0xc] sm:$0xf]
        %v365 = vld [vmem:[%s321] sm:$0xf]
        %v366 = vld [vmem:[%s321 + $0x4] sm:$0xf]
        %v367 = vld [vmem:[%s321 + $0x8] sm:$0xf]
        %v368 = vld [vmem:[%s321 + $0xc] sm:$0xf]
        %v373 = vunpack.c.l.b16 %v361
        %v374 = vunpack.c.l.b16 %v362
        %v375 = vunpack.c.l.b16 %v363
        %v376 = vunpack.c.l.b16 %v364
        %v377 = vpack.c.b16 %v374, %v373
        %v378 = vpack.c.b16 %v376, %v375
        %v385 = vunpack.c.l.b16 %v365
        %v386 = vunpack.c.l.b16 %v366
        %v387 = vunpack.c.l.b16 %v367
        %v388 = vunpack.c.l.b16 %v368
        %v389 = vpack.c.b16 %v386, %v385
        %v390 = vpack.c.b16 %v388, %v387
        %v391 = vld [vmem:[%s2] sm:$0xf]
        %v392 = vld [vmem:[%s2 + $0x4] sm:$0xf]
        %s393 = scalar_lea.vmem %s2, 8
        %v394 = vld [vmem:[%s393] sm:$0xf]
        %v395 = vld [vmem:[%s393 + $0x4] sm:$0xf]
        %v398 = vunpack.c.l.b16 %v394
        %v399 = vunpack.c.l.b16 %v395
        %v400 = vpack.c.b16 %v399, %v398
        %401 = vrot.lane.b32.xlu0 %v377, 127
        %v402 = vpop.permute.xlu0 %401
        %403 = vrot.lane.b32.xlu0 %v389, 127
        %v404 = vpop.permute.xlu0 %403
        %405 = vrot.lane.b32.xlu0 %v378, 127
        %v406 = vpop.permute.xlu0 %405
        %407 = vrot.lane.b32.xlu0 %v390, 127
        %v408 = vpop.permute.xlu0 %407
        %vm409 = vcmask 1039360
        %v410 = vsel %vm409, %v402, %v404
        %v411 = vsel %vm409, %v406, %v408
        %vm414 = vcmask 261120
        %v416 = vsel %vm414, %v400, 0
        %418 = vmatpush.bf16.msra.mxu0 0
        %419 = vmatpush.bf16.msra.mxu0 0
        %420 = vmatpush.bf16.msra.mxu0 0
        %421 = vmatpush.bf16.msra.mxu0 0
        %422 = vmatpush.bf16.msra.mxu0 0
        %423 = vmatpush.bf16.msra.mxu0 0
        %424 = vmatpush.bf16.msra.mxu0 %v411
        %425 = vmatpush.bf16.msra.mxu0 %v410
        %426 = vmatmul.bf16.gmra.mxu0 %v416
        %v427 = vpop.f32.mrf.mxu0
        %v428 = vadd.f32 0.0, %v427
        %v429 = vpop.f32.mrf.mxu0
        %v430 = vadd.f32 0.0, %v429
        %431 = vdwg.mxu0
        %v434 = vunpack.c.l.b16 %v391
        %v435 = vunpack.c.l.b16 %v392
        %v436 = vpack.c.b16 %v435, %v434
        %v438 = vsel %vm414, %v436, 0
        %440 = vmatpush.bf16.msra.mxu0 0
        %441 = vmatpush.bf16.msra.mxu0 0
        %442 = vmatpush.bf16.msra.mxu0 0
        %443 = vmatpush.bf16.msra.mxu0 0
        %444 = vmatpush.bf16.msra.mxu0 0
        %445 = vmatpush.bf16.msra.mxu0 0
        %446 = vmatpush.bf16.msra.mxu0 %v378
        %447 = vmatpush.bf16.msra.mxu0 %v377
        %448 = vmatmul.bf16.gmra.mxu0 %v438
        %v449 = vpop.f32.mrf.mxu0
        %v450 = vadd.f32 %v428, %v449
        %v451 = vpop.f32.mrf.mxu0
        %v452 = vadd.f32 %v430, %v451
        %453 = vdwg.mxu0
        %s454 = scalar_lea.vmem %s2, 16
        %v455 = vld [vmem:[%s454] sm:$0xf]
        %v456 = vld [vmem:[%s454 + $0x4] sm:$0xf]
        %v459 = vunpack.c.l.b16 %v455
        %v460 = vunpack.c.l.b16 %v456
        %v461 = vpack.c.b16 %v460, %v459
        %462 = vrot.lane.b32.xlu0 %v377, 126
        %v463 = vpop.permute.xlu0 %462
        %464 = vrot.lane.b32.xlu0 %v389, 126
        %v465 = vpop.permute.xlu0 %464
        %466 = vrot.lane.b32.xlu0 %v378, 126
        %v467 = vpop.permute.xlu0 %466
        %468 = vrot.lane.b32.xlu0 %v390, 126
        %v469 = vpop.permute.xlu0 %468
        %vm470 = vcmask 1031168
        %v471 = vsel %vm470, %v463, %v465
        %v472 = vsel %vm470, %v467, %v469
        %v476 = vsel %vm414, %v461, 0
        %478 = vmatpush.bf16.msra.mxu0 0
        %479 = vmatpush.bf16.msra.mxu0 0
        %480 = vmatpush.bf16.msra.mxu0 0
        %481 = vmatpush.bf16.msra.mxu0 0
        %482 = vmatpush.bf16.msra.mxu0 0
        %483 = vmatpush.bf16.msra.mxu0 0
        %484 = vmatpush.bf16.msra.mxu0 %v472
        %485 = vmatpush.bf16.msra.mxu0 %v471
        %486 = vmatmul.bf16.gmra.mxu0 %v476
        %v487 = vpop.f32.mrf.mxu0
        %v488 = vadd.f32 0.0, %v487
        %v489 = vpop.f32.mrf.mxu0
        %v490 = vadd.f32 0.0, %v489
        %491 = vdwg.mxu0
        %v492 = vadd.f32 %v450, %v488
        %v493 = vadd.f32 %v452, %v490
        %s494 = scalar_lea.vmem %s2, 24
        %v495 = vld [vmem:[%s494] sm:$0xf]
        %v496 = vld [vmem:[%s494 + $0x4] sm:$0xf]
        %v499 = vunpack.c.l.b16 %v495
        %v500 = vunpack.c.l.b16 %v496
        %v501 = vpack.c.b16 %v500, %v499
        %502 = vrot.lane.b32.xlu0 %v377, 125
        %v503 = vpop.permute.xlu0 %502
        %504 = vrot.lane.b32.xlu0 %v389, 125
        %v505 = vpop.permute.xlu0 %504
        %506 = vrot.lane.b32.xlu0 %v378, 125
        %v507 = vpop.permute.xlu0 %506
        %508 = vrot.lane.b32.xlu0 %v390, 125
        %v509 = vpop.permute.xlu0 %508
        %vm510 = vcmask 1022976
        %v511 = vsel %vm510, %v503, %v505
        %v512 = vsel %vm510, %v507, %v509
        %v516 = vsel %vm414, %v501, 0
        %518 = vmatpush.bf16.msra.mxu0 0
        %519 = vmatpush.bf16.msra.mxu0 0
        %520 = vmatpush.bf16.msra.mxu0 0
        %521 = vmatpush.bf16.msra.mxu0 0
        %522 = vmatpush.bf16.msra.mxu0 0
        %523 = vmatpush.bf16.msra.mxu0 0
        %524 = vmatpush.bf16.msra.mxu0 %v512
        %525 = vmatpush.bf16.msra.mxu0 %v511
        %526 = vmatmul.bf16.gmra.mxu0 %v516
        %v527 = vpop.f32.mrf.mxu0
        %v528 = vadd.f32 0.0, %v527
        %v529 = vpop.f32.mrf.mxu0
        %v530 = vadd.f32 0.0, %v529
        %531 = vdwg.mxu0
        %v532 = vadd.f32 %v492, %v528
        %v533 = vadd.f32 %v493, %v530
        %s534 = scalar_lea.vmem %s2, 32
        %v535 = vld [vmem:[%s534] sm:$0xf]
        %v536 = vld [vmem:[%s534 + $0x4] sm:$0xf]
        %v539 = vunpack.c.l.b16 %v535
        %v540 = vunpack.c.l.b16 %v536
        %v541 = vpack.c.b16 %v540, %v539
        %542 = vrot.lane.b32.xlu0 %v377, 124
        %v543 = vpop.permute.xlu0 %542
        %544 = vrot.lane.b32.xlu0 %v389, 124
        %v545 = vpop.permute.xlu0 %544
        %546 = vrot.lane.b32.xlu0 %v378, 124
        %v547 = vpop.permute.xlu0 %546
        %548 = vrot.lane.b32.xlu0 %v390, 124
        %v549 = vpop.permute.xlu0 %548
        %vm550 = vcmask 1014784
        %v551 = vsel %vm550, %v543, %v545
        %v552 = vsel %vm550, %v547, %v549
        %v556 = vsel %vm414, %v541, 0
        %558 = vmatpush.bf16.msra.mxu0 0
        %559 = vmatpush.bf16.msra.mxu0 0
        %560 = vmatpush.bf16.msra.mxu0 0
        %561 = vmatpush.bf16.msra.mxu0 0
        %562 = vmatpush.bf16.msra.mxu0 0
        %563 = vmatpush.bf16.msra.mxu0 0
        %564 = vmatpush.bf16.msra.mxu0 %v552
        %565 = vmatpush.bf16.msra.mxu0 %v551
        %566 = vmatmul.bf16.gmra.mxu0 %v556
        %v567 = vpop.f32.mrf.mxu0
        %v568 = vadd.f32 0.0, %v567
        %v569 = vpop.f32.mrf.mxu0
        %v570 = vadd.f32 0.0, %v569
        %571 = vdwg.mxu0
        %v572 = vadd.f32 %v532, %v568
        %v573 = vadd.f32 %v533, %v570
        %s574 = scalar_lea.vmem %s2, 40
        %v575 = vld [vmem:[%s574] sm:$0xf]
        %v576 = vld [vmem:[%s574 + $0x4] sm:$0xf]
        %v579 = vunpack.c.l.b16 %v575
        %v580 = vunpack.c.l.b16 %v576
        %v581 = vpack.c.b16 %v580, %v579
        %582 = vrot.lane.b32.xlu0 %v377, 123
        %v583 = vpop.permute.xlu0 %582
        %584 = vrot.lane.b32.xlu0 %v389, 123
        %v585 = vpop.permute.xlu0 %584
        %586 = vrot.lane.b32.xlu0 %v378, 123
        %v587 = vpop.permute.xlu0 %586
        %588 = vrot.lane.b32.xlu0 %v390, 123
        %v589 = vpop.permute.xlu0 %588
        %vm590 = vcmask 1006592
        %v591 = vsel %vm590, %v583, %v585
        %v592 = vsel %vm590, %v587, %v589
        %v596 = vsel %vm414, %v581, 0
        %598 = vmatpush.bf16.msra.mxu0 0
        %599 = vmatpush.bf16.msra.mxu0 0
        %600 = vmatpush.bf16.msra.mxu0 0
        %601 = vmatpush.bf16.msra.mxu0 0
        %602 = vmatpush.bf16.msra.mxu0 0
        %603 = vmatpush.bf16.msra.mxu0 0
        %604 = vmatpush.bf16.msra.mxu0 %v592
        %605 = vmatpush.bf16.msra.mxu0 %v591
        %606 = vmatmul.bf16.gmra.mxu0 %v596
        %v607 = vpop.f32.mrf.mxu0
        %v608 = vadd.f32 0.0, %v607
        %v609 = vpop.f32.mrf.mxu0
        %v610 = vadd.f32 0.0, %v609
        %611 = vdwg.mxu0
        %v612 = vadd.f32 %v572, %v608
        %v613 = vadd.f32 %v573, %v610
        %v614 = vld [vmem:[%s3] sm:$0xff]
        %v615 = vld [vmem:[%s3 + $0x8] sm:$0xff]
        %617 = vset.pattern.permute.xlu0 0
        %618 = vperm.xlu0 %617, %v614
        %v619 = vpop.permute.xlu0 %618
        %622 = vset.pattern.permute.xlu0 0
        %623 = vperm.xlu0 %622, %v615
        %v624 = vpop.permute.xlu0 %623
        %v626 = vadd.f32 %v612, %v619
        %v627 = vadd.f32 %v613, %v624
        %vm628 = vcmp.ge.f32.partialorder %v626, 0.0
        %vm629 = vcmp.ge.f32.partialorder %v627, 0.0
        %v630 = vmul.f32 %v626, 0.2
        %v631 = vmul.f32 %v627, 0.2
        %v632 = vsel %vm628, %v626, %v630
        %v633 = vsel %vm629, %v627, %v631
        %v634 = vpack.c.bf16 %v632, %v632
        %v635 = vpack.c.bf16 %v633, %v633
        %636 = vst [vmem:[%s359] sm:$0xf] %v634
        %637 = vst [vmem:[%s359 + $0x4] sm:$0xf] %v635
        %p638 = scmp.lt.s32.totalorder %s19, 1
        %s639 = scalar_select %p638, %s19, 1
        %p640 = scmp.lt.s32.totalorder %s20, 0
        %s641 = scalar_select %p640, %s20, 0
        %s642 = smul.addr %s639, 2
        %s643 = sadd.s32 %s641, %s642
        %s644 = smul.addr %s643, 4
        %s645 = scalar_lea.vmem %s4, %s644
        // Predicated region
        $region119: #{_lambda_.4} parent=109 // pred_check
          %p646 = pneg %p147
        $region120: #{_lambda_.4} parent=109 // pred_check_branch
          %648 = sbr.rel (%p646) target = $region122
        $region121: #{_lambda_.4} parent=109 // pred_region
          _
        $region122: #{_lambda_.4} parent=109 // pred_fallthru
          _
      $region110: #{_lambda_.4} parent=5 // pred_fallthru
        _
      %p649 = scmp.le.s32.totalorder 2, %s10
      // Predicated region
      $region123: #{_lambda_.4} parent=5 // pred_check
        %p650 = pneg %p649
      $region124: #{_lambda_.4} parent=5 // pred_check_branch
        %652 = sbr.rel (%p650) target = $region126
      $region125: #{_lambda_.4} parent=5 // pred_region
        %s653 = ssub.s32 %s10, 2
        // Predicated region
        $region127: #{_lambda_.4} parent=125 // pred_check
          %p654 = pneg %p153
        $region128: #{_lambda_.4} parent=125 // pred_check_branch
          %656 = sbr.rel (%p654) target = $region130
        $region129: #{_lambda_.4} parent=125 // pred_region
          %p657 = scmp.lt.s32.totalorder %s21, 1
          %s658 = scalar_select %p657, %s21, 1
          %p659 = scmp.lt.s32.totalorder %s22, 0
          %s660 = scalar_select %p659, %s22, 0
          %s661 = smul.addr %s658, 2
          %s662 = sadd.s32 %s660, %s661
          %s663 = smul.addr %s662, 4
          %s664 = scalar_lea.vmem %s4, %s663
        $region130: #{_lambda_.4} parent=125 // pred_fallthru
          _
      $region126: #{_lambda_.4} parent=5 // pred_fallthru
        _
    $region6: #{_lambda_.4} parent=1 // loop_footer
      %s14 = sadd.s32 1, %s10
    $region7: #{_lambda_.4} parent=1 // loop_footer_branch
      %9 = sbr.rel target = $region3
    $region8: #{_lambda_.4} parent=1 // loop_exit
      _

// kernel: _lambda_.5
$region0: #{_lambda_.5}
  #allocation0 [shape = 'u32[]', space=smem, size = 0x4, offset = 0x4, fixed_abs, tag = 'smem constant byte address 0x4 - core index']
  #allocation1 [shape = 'u32[72,128]{1,0:T(1,128)}', space=vmem, size = 0x9000, scoped, tag = 'internal scratch']
  #allocation2 [shape = 'f32[1,1]{1,0:T(1,128)S(1)}', space=vmem, size = 0x200, scoped, tag = 'scoped memory for _lambda_.5']
  %s0 = inlined_call_operand.vmem [shape: bf16[2,16,256], index: 0, kind: input, shape index: {}, may-alias: {0,1}]
  %s1 = inlined_call_operand.vmem [shape: bf16[2,16,256], index: 1, kind: input, shape index: {}, may-alias: {0,1}]
  %s2 = inlined_call_operand.vmem [shape: bf16[3,1,16], index: 2, kind: input, shape index: {}]
  %s3 = inlined_call_operand.<no memory space> [shape: f32[1,1], index: 3, kind: input, shape index: {}]
  %s4 = inlined_call_operand.hbm [shape: f32[2,1,128], index: 4, kind: output, shape index: {}]
  %s5 = sld [smem:[#allocation0]]
  $region131: #{_lambda_.5} parent=0
    _
  %s7 = ssub.s32 1, %s5
  %s8 = scalar_select 0, %s7, %s5
  %v9 = vstv %s3
  %10 = vst [vmem:[#allocation2] sm:$0x1] %v9
  $region1: #{_lambda_.5} parent=0
    #allocation3 [shape = 'u8[8192]{0}', space=vmem, size = 0x2000, scoped, tag = 'input window, operand 0']
    #allocation4 [shape = 'u8[8192]{0}', space=vmem, size = 0x2000, scoped, tag = 'input window, operand 1']
    #allocation5 [shape = 'u8[1024]{0}', space=vmem, size = 0x400, scoped, tag = 'output window, operand 0']
    #allocation6 [shape = 's32[2]{0}', space=sflag, size = 0x8, scoped, tag = 'scoped memory for _lambda_.5']
    %11 = vsyncpa [#allocation6], 0
    %s12 = scalar_lea.sflag [#allocation6], 1
    %13 = vsyncpa %s12, 0
    loop: start=0, step=1, limit=4
    $region2: #{_lambda_.5} parent=1 // loop_pre_header
      _
    $region3: #{_lambda_.5} parent=1 // loop_header
      %s15 = sphi 0, %s19
      %p16 = scmp.ge.s32.totalorder %s15, 4
      %s22 = sphi 0, %s34
      %s23 = sphi 0, %s30
      %s24 = sphi 0, %s22
      %s25 = sphi 0, %s23
      %s26 = sphi 0, %s24
      %s27 = sphi 0, %s25
      %s39 = sphi 0, %s41
      %s42 = sphi 0, %s39
      %s43 = sphi 0, %s42
      %s59 = sphi 0, %s43
      %s69 = sphi 0, %s71
      %s72 = sphi 0, %s69
      %s73 = sphi 0, %s72
      %s89 = sphi 0, %s73
      %s93 = sphi 0, %s93
      %s95 = sphi 0, %s93
      %s96 = sphi 0, %s95
      %s110 = sphi 0, %s96
      %s114 = sphi 0, %s114
      %s116 = sphi 0, %s114
      %s117 = sphi 0, %s116
      %s131 = sphi 0, %s117
      %s139 = sphi 0, %s141
      %s142 = sphi 0, %s139
      %s143 = sphi 0, %s142
      %s159 = sphi 0, %s143
    $region4: #{_lambda_.5} parent=1 // loop_header_branch
      %18 = sbr.rel (%p16) target = $region8
    $region5: #{_lambda_.5} parent=1 // loop_body
      %s20 = ssub.s32 %s15, 1
      %s21 = ssub.s32 %s15, 2
      %s28 = sadd.s32 1, %s23
      %p29 = scmp.ge.s32.totalorder %s28, 1
      %s30 = scalar_select %p29, 0, %s28
      %s31 = sadd.s32 1, %s22
      %s32 = scalar_select %p29, %s31, %s22
      %p33 = scmp.ge.s32.totalorder %s32, 2
      %s34 = scalar_select %p33, 0, %s32
      %s35 = ssub.s32 %s22, %s34
      %s36 = ssub.s32 %s23, %s30
      %s37 = sor.u32 %s35, %s36
      %p38 = scmp.eq.s32.totalorder %s37, 0
      %s40 = sadd.s32 %s39, 1
      %s41 = scalar_select %p38, %s39, %s40
      %p44 = pneg %p38
      %p45 = scmp.eq.s32.totalorder %s15, 1
      %p46 = por %p44, %p45
      %p47 = scmp.ne.s32.totalorder %s39, %s42
      %p48 = scmp.eq.s32.totalorder %s15, 0
      %p49 = por %p47, %p48
      %p50 = scmp.ne.s32.totalorder %s39, %s42
      %p51 = scmp.eq.s32.totalorder %s20, 1
      %p52 = por %p50, %p51
      %p53 = scmp.ne.s32.totalorder %s42, %s43
      %p54 = scmp.eq.s32.totalorder %s20, 0
      %p55 = por %p53, %p54
      %p56 = scmp.ne.s32.totalorder %s42, %s43
      %p57 = scmp.eq.s32.totalorder %s21, 1
      %p58 = por %p56, %p57
      %p60 = scmp.ne.s32.totalorder %s43, %s59
      %p61 = scmp.eq.s32.totalorder %s21, 0
      %p62 = por %p60, %p61
      %s63 = sadd.s32 %s23, 1
      %s64 = sadd.s32 %s30, 1
      %s65 = ssub.s32 %s22, %s34
      %s66 = ssub.s32 %s63, %s64
      %s67 = sor.u32 %s65, %s66
      %p68 = scmp.eq.s32.totalorder %s67, 0
      %s70 = sadd.s32 %s69, 1
      %s71 = scalar_select %p68, %s69, %s70
      %p74 = pneg %p68
      %p75 = scmp.eq.s32.totalorder %s15, 1
      %p76 = por %p74, %p75
      %p77 = scmp.ne.s32.totalorder %s69, %s72
      %p78 = scmp.eq.s32.totalorder %s15, 0
      %p79 = por %p77, %p78
      %p80 = scmp.ne.s32.totalorder %s69, %s72
      %p81 = scmp.eq.s32.totalorder %s20, 1
      %p82 = por %p80, %p81
      %p83 = scmp.ne.s32.totalorder %s72, %s73
      %p84 = scmp.eq.s32.totalorder %s20, 0
      %p85 = por %p83, %p84
      %p86 = scmp.ne.s32.totalorder %s72, %s73
      %p87 = scmp.eq.s32.totalorder %s21, 1
      %p88 = por %p86, %p87
      %p90 = scmp.ne.s32.totalorder %s73, %s89
      %p91 = scmp.eq.s32.totalorder %s21, 0
      %p92 = por %p90, %p91
      %s94 = sadd.s32 %s93, 1
      %p97 = scmp.eq.s32.totalorder %s15, 1
      %p98 = scmp.ne.s32.totalorder %s93, %s95
      %p99 = scmp.eq.s32.totalorder %s15, 0
      %p100 = por %p98, %p99
      %p101 = scmp.ne.s32.totalorder %s93, %s95
      %p102 = scmp.eq.s32.totalorder %s20, 1
      %p103 = por %p101, %p102
      %p104 = scmp.ne.s32.totalorder %s95, %s96
      %p105 = scmp.eq.s32.totalorder %s20, 0
      %p106 = por %p104, %p105
      %p107 = scmp.ne.s32.totalorder %s95, %s96
      %p108 = scmp.eq.s32.totalorder %s21, 1
      %p109 = por %p107, %p108
      %p111 = scmp.ne.s32.totalorder %s96, %s110
      %p112 = scmp.eq.s32.totalorder %s21, 0
      %p113 = por %p111, %p112
      %s115 = sadd.s32 %s114, 1
      %p118 = scmp.eq.s32.totalorder %s15, 1
      %p119 = scmp.ne.s32.totalorder %s114, %s116
      %p120 = scmp.eq.s32.totalorder %s15, 0
      %p121 = por %p119, %p120
      %p122 = scmp.ne.s32.totalorder %s114, %s116
      %p123 = scmp.eq.s32.totalorder %s20, 1
      %p124 = por %p122, %p123
      %p125 = scmp.ne.s32.totalorder %s116, %s117
      %p126 = scmp.eq.s32.totalorder %s20, 0
      %p127 = por %p125, %p126
      %p128 = scmp.ne.s32.totalorder %s116, %s117
      %p129 = scmp.eq.s32.totalorder %s21, 1
      %p130 = por %p128, %p129
      %p132 = scmp.ne.s32.totalorder %s117, %s131
      %p133 = scmp.eq.s32.totalorder %s21, 0
      %p134 = por %p132, %p133
      %s135 = ssub.s32 %s22, %s34
      %s136 = ssub.s32 %s23, %s30
      %s137 = sor.u32 %s135, %s136
      %p138 = scmp.eq.s32.totalorder %s137, 0
      %s140 = sadd.s32 %s139, 1
      %s141 = scalar_select %p138, %s139, %s140
      %p144 = pneg %p138
      %p145 = scmp.eq.s32.totalorder %s15, 1
      %p146 = por %p144, %p145
      %p147 = scmp.ne.s32.totalorder %s139, %s142
      %p148 = scmp.eq.s32.totalorder %s15, 0
      %p149 = por %p147, %p148
      %p150 = scmp.ne.s32.totalorder %s139, %s142
      %p151 = scmp.eq.s32.totalorder %s20, 1
      %p152 = por %p150, %p151
      %p153 = scmp.ne.s32.totalorder %s142, %s143
      %p154 = scmp.eq.s32.totalorder %s20, 0
      %p155 = por %p153, %p154
      %p156 = scmp.ne.s32.totalorder %s142, %s143
      %p157 = scmp.eq.s32.totalorder %s21, 1
      %p158 = por %p156, %p157
      %p160 = scmp.ne.s32.totalorder %s143, %s159
      %p161 = scmp.eq.s32.totalorder %s21, 0
      %p162 = por %p160, %p161
      %p163 = scmp.le.s32.totalorder 1, %s15
      %p164 = scmp.lt.s32.totalorder %s15, 3
      %p165 = pnand %p163, %p164
      %p166 = pneg %p165
      // Predicated region
      $region9: #{_lambda_.5} parent=5 // pred_check
        _
      $region10: #{_lambda_.5} parent=5 // pred_check_branch
        %168 = sbr.rel (%p165) target = $region12
      $region11: #{_lambda_.5} parent=5 // pred_region
        %s169 = ssub.s32 %s15, 1
        // Predicated region
        $region13: #{_lambda_.5} parent=11 // pred_check
          %p170 = pneg %p106
        $region14: #{_lambda_.5} parent=11 // pred_check_branch
          %172 = sbr.rel (%p170) target = $region16
        $region15: #{_lambda_.5} parent=11 // pred_region
          _
        $region16: #{_lambda_.5} parent=11 // pred_fallthru
          _
        // Predicated region
        $region17: #{_lambda_.5} parent=11 // pred_check
          %p173 = pneg %p127
        $region18: #{_lambda_.5} parent=11 // pred_check_branch
          %175 = sbr.rel (%p173) target = $region20
        $region19: #{_lambda_.5} parent=11 // pred_region
          _
        $region20: #{_lambda_.5} parent=11 // pred_fallthru
          _
      $region12: #{_lambda_.5} parent=5 // pred_fallthru
        _
      %p176 = scmp.lt.s32.totalorder %s15, 2
      // Predicated region
      $region21: #{_lambda_.5} parent=5 // pred_check
        %p177 = pneg %p176
      $region22: #{_lambda_.5} parent=5 // pred_check_branch
        %179 = sbr.rel (%p177) target = $region24
      $region23: #{_lambda_.5} parent=5 // pred_region
        // Predicated region
        $region25: #{_lambda_.5} parent=23 // pred_check
          %p180 = pneg %p49
        $region26: #{_lambda_.5} parent=23 // pred_check_branch
          %182 = sbr.rel (%p180) target = $region28
        $region27: #{_lambda_.5} parent=23 // pred_region
          %s183 = sand.u32 %s39, 1
          %s184 = sand.u32 %s39, 1
          %s185 = smul.addr %s184, 8
          %s186 = scalar_lea.vmem [#allocation3], %s185
          %s187 = smul.addr %s22, 4
          %s188 = sadd.s32 %s23, %s187
          %s189 = smul.addr %s188, 4
          %s190 = scalar_lea.vmem %s0, %s189
          // Predicated region
          $region29: #{_lambda_.5} parent=27 // pred_check
            _
          $region30: #{_lambda_.5} parent=27 // pred_check_branch
            %192 = sbr.rel (0) target = $region32
          $region31: #{_lambda_.5} parent=27 // pred_region
            // Predicated region
            $region33: #{_lambda_.5} parent=31 // pred_check
              _
            $region34: #{_lambda_.5} parent=31 // pred_check_branch
              %194 = sbr.rel target = $region36
            $region35: #{_lambda_.5} parent=31 // pred_region
              // Predicated region
              $region48: #{_lambda_.5} parent=35 // pred_check
                _
              $region49: #{_lambda_.5} parent=35 // pred_check_branch
                %212 = sbr.rel (0) target = $region51
              $region50: #{_lambda_.5} parent=35 // pred_region
                loop: start=0, step=1, limit=1
                $region52: #{_lambda_.5} parent=50 // loop_pre_header
                  _
                $region53: #{_lambda_.5} parent=50 // loop_header
                  %s214 = sphi 0, %s218
                  %p215 = scmp.ge.s32.totalorder %s214, 1
                  %s219 = sphi %s190, %s190
                  %s220 = sphi %s186, %s186
                $region54: #{_lambda_.5} parent=50 // loop_header_branch
                  %217 = sbr.rel (%p215) target = $region58
                $region55: #{_lambda_.5} parent=50 // loop_body
                  _
                $region56: #{_lambda_.5} parent=50 // loop_footer
                  %s218 = sadd.s32 1, %s214
                $region57: #{_lambda_.5} parent=50 // loop_footer_branch
                  %213 = sbr.rel target = $region53
                $region58: #{_lambda_.5} parent=50 // loop_exit
                  _
                %s222 = ssub.s32 16, 1
                loop: start=0, step=1, limit=1
                $region59: #{_lambda_.5} parent=50 // loop_pre_header
                  _
                $region60: #{_lambda_.5} parent=50 // loop_header
                  %s224 = sphi 0, %s228
                  %p225 = scmp.ge.s32.totalorder %s224, 1
                  %s229 = sphi %s190, %s190
                  %s230 = sphi %s186, %s186
                $region61: #{_lambda_.5} parent=50 // loop_header_branch
                  %227 = sbr.rel (%p225) target = $region65
                $region62: #{_lambda_.5} parent=50 // loop_body
                  %v231 = vld [vmem:[%s229] sm:%s222]
                  %232 = vst [vmem:[%s230] sm:%s222] %v231
                  %v233 = vld [vmem:[%s229 + $0x8] sm:%s222]
                  %234 = vst [vmem:[%s230 + $0x4] sm:%s222] %v233
                $region63: #{_lambda_.5} parent=50 // loop_footer
                  %s228 = sadd.s32 1, %s224
                $region64: #{_lambda_.5} parent=50 // loop_footer_branch
                  %223 = sbr.rel target = $region60
                $region65: #{_lambda_.5} parent=50 // loop_exit
                  _
              $region51: #{_lambda_.5} parent=35 // pred_fallthru
                _
            $region36: #{_lambda_.5} parent=31 // pred_fallthru
              _
            // Predicated region
            $region37: #{_lambda_.5} parent=31 // pred_check
              _
            $region38: #{_lambda_.5} parent=31 // pred_check_branch
              %196 = sbr.rel (0) target = $region40
            $region39: #{_lambda_.5} parent=31 // pred_region
              %s198 = ssub.s32 16, 1
              loop: start=0, step=1, limit=1
              $region41: #{_lambda_.5} parent=39 // loop_pre_header
                _
              $region42: #{_lambda_.5} parent=39 // loop_header
                %s200 = sphi 0, %s204
                %p201 = scmp.ge.s32.totalorder %s200, 1
                %s205 = sphi %s190, %s190
                %s206 = sphi %s186, %s186
              $region43: #{_lambda_.5} parent=39 // loop_header_branch
                %203 = sbr.rel (%p201) target = $region47
              $region44: #{_lambda_.5} parent=39 // loop_body
                %v207 = vld [vmem:[%s205] sm:%s198]
                %208 = vst [vmem:[%s206] sm:%s198] %v207
                %v209 = vld [vmem:[%s205 + $0x8] sm:%s198]
                %210 = vst [vmem:[%s206 + $0x4] sm:%s198] %v209
              $region45: #{_lambda_.5} parent=39 // loop_footer
                %s204 = sadd.s32 1, %s200
              $region46: #{_lambda_.5} parent=39 // loop_footer_branch
                %199 = sbr.rel target = $region42
              $region47: #{_lambda_.5} parent=39 // loop_exit
                _
            $region40: #{_lambda_.5} parent=31 // pred_fallthru
              _
          $region32: #{_lambda_.5} parent=27 // pred_fallthru
            _
          %235 = vnop
        $region28: #{_lambda_.5} parent=23 // pred_fallthru
          _
        // Predicated region
        $region66: #{_lambda_.5} parent=23 // pred_check
          %p236 = pneg %p79
        $region67: #{_lambda_.5} parent=23 // pred_check_branch
          %238 = sbr.rel (%p236) target = $region69
        $region68: #{_lambda_.5} parent=23 // pred_region
          %s239 = sand.u32 %s69, 1
          %s240 = sand.u32 %s69, 1
          %s241 = smul.addr %s240, 8
          %s242 = scalar_lea.vmem [#allocation4], %s241
          %s243 = sadd.s32 %s23, 1
          %s244 = smul.addr %s22, 4
          %s245 = sadd.s32 %s243, %s244
          %s246 = smul.addr %s245, 4
          %s247 = scalar_lea.vmem %s1, %s246
          // Predicated region
          $region70: #{_lambda_.5} parent=68 // pred_check
            _
          $region71: #{_lambda_.5} parent=68 // pred_check_branch
            %249 = sbr.rel (0) target = $region73
          $region72: #{_lambda_.5} parent=68 // pred_region
            // Predicated region
            $region74: #{_lambda_.5} parent=72 // pred_check
              _
            $region75: #{_lambda_.5} parent=72 // pred_check_branch
              %251 = sbr.rel target = $region77
            $region76: #{_lambda_.5} parent=72 // pred_region
              // Predicated region
              $region89: #{_lambda_.5} parent=76 // pred_check
                _
              $region90: #{_lambda_.5} parent=76 // pred_check_branch
                %269 = sbr.rel (0) target = $region92
              $region91: #{_lambda_.5} parent=76 // pred_region
                loop: start=0, step=1, limit=1
                $region93: #{_lambda_.5} parent=91 // loop_pre_header
                  _
                $region94: #{_lambda_.5} parent=91 // loop_header
                  %s271 = sphi 0, %s275
                  %p272 = scmp.ge.s32.totalorder %s271, 1
                  %s276 = sphi %s247, %s247
                  %s277 = sphi %s242, %s242
                $region95: #{_lambda_.5} parent=91 // loop_header_branch
                  %274 = sbr.rel (%p272) target = $region99
                $region96: #{_lambda_.5} parent=91 // loop_body
                  _
                $region97: #{_lambda_.5} parent=91 // loop_footer
                  %s275 = sadd.s32 1, %s271
                $region98: #{_lambda_.5} parent=91 // loop_footer_branch
                  %270 = sbr.rel target = $region94
                $region99: #{_lambda_.5} parent=91 // loop_exit
                  _
                %s279 = ssub.s32 16, 1
                loop: start=0, step=1, limit=1
                $region100: #{_lambda_.5} parent=91 // loop_pre_header
                  _
                $region101: #{_lambda_.5} parent=91 // loop_header
                  %s281 = sphi 0, %s285
                  %p282 = scmp.ge.s32.totalorder %s281, 1
                  %s286 = sphi %s247, %s247
                  %s287 = sphi %s242, %s242
                $region102: #{_lambda_.5} parent=91 // loop_header_branch
                  %284 = sbr.rel (%p282) target = $region106
                $region103: #{_lambda_.5} parent=91 // loop_body
                  %v288 = vld [vmem:[%s286] sm:%s279]
                  %289 = vst [vmem:[%s287] sm:%s279] %v288
                  %v290 = vld [vmem:[%s286 + $0x8] sm:%s279]
                  %291 = vst [vmem:[%s287 + $0x4] sm:%s279] %v290
                $region104: #{_lambda_.5} parent=91 // loop_footer
                  %s285 = sadd.s32 1, %s281
                $region105: #{_lambda_.5} parent=91 // loop_footer_branch
                  %280 = sbr.rel target = $region101
                $region106: #{_lambda_.5} parent=91 // loop_exit
                  _
              $region92: #{_lambda_.5} parent=76 // pred_fallthru
                _
            $region77: #{_lambda_.5} parent=72 // pred_fallthru
              _
            // Predicated region
            $region78: #{_lambda_.5} parent=72 // pred_check
              _
            $region79: #{_lambda_.5} parent=72 // pred_check_branch
              %253 = sbr.rel (0) target = $region81
            $region80: #{_lambda_.5} parent=72 // pred_region
              %s255 = ssub.s32 16, 1
              loop: start=0, step=1, limit=1
              $region82: #{_lambda_.5} parent=80 // loop_pre_header
                _
              $region83: #{_lambda_.5} parent=80 // loop_header
                %s257 = sphi 0, %s261
                %p258 = scmp.ge.s32.totalorder %s257, 1
                %s262 = sphi %s247, %s247
                %s263 = sphi %s242, %s242
              $region84: #{_lambda_.5} parent=80 // loop_header_branch
                %260 = sbr.rel (%p258) target = $region88
              $region85: #{_lambda_.5} parent=80 // loop_body
                %v264 = vld [vmem:[%s262] sm:%s255]
                %265 = vst [vmem:[%s263] sm:%s255] %v264
                %v266 = vld [vmem:[%s262 + $0x8] sm:%s255]
                %267 = vst [vmem:[%s263 + $0x4] sm:%s255] %v266
              $region86: #{_lambda_.5} parent=80 // loop_footer
                %s261 = sadd.s32 1, %s257
              $region87: #{_lambda_.5} parent=80 // loop_footer_branch
                %256 = sbr.rel target = $region83
              $region88: #{_lambda_.5} parent=80 // loop_exit
                _
            $region81: #{_lambda_.5} parent=72 // pred_fallthru
              _
          $region73: #{_lambda_.5} parent=68 // pred_fallthru
            _
          %292 = vnop
        $region69: #{_lambda_.5} parent=23 // pred_fallthru
          _
      $region24: #{_lambda_.5} parent=5 // pred_fallthru
        _
      %p293 = scmp.le.s32.totalorder 1, %s15
      %p294 = scmp.lt.s32.totalorder %s15, 3
      %p295 = pnand %p293, %p294
      %p296 = pneg %p295
      // Predicated region
      $region107: #{_lambda_.5} parent=5 // pred_check
        _
      $region108: #{_lambda_.5} parent=5 // pred_check_branch
        %298 = sbr.rel (%p295) target = $region110
      $region109: #{_lambda_.5} parent=5 // pred_region
        %s299 = ssub.s32 %s15, 1
        %s300 = sand.u32 %s42, 1
        %s301 = sand.u32 %s42, 1
        %s302 = smul.addr %s301, 8
        %s303 = scalar_lea.vmem [#allocation3], %s302
        // Predicated region
        $region111: #{_lambda_.5} parent=109 // pred_check
          %p304 = pneg %p55
        $region112: #{_lambda_.5} parent=109 // pred_check_branch
          %306 = sbr.rel (%p304) target = $region114
        $region113: #{_lambda_.5} parent=109 // pred_region
          _
        $region114: #{_lambda_.5} parent=109 // pred_fallthru
          _
        %s307 = sand.u32 %s72, 1
        %s308 = sand.u32 %s72, 1
        %s309 = smul.addr %s308, 8
        %s310 = scalar_lea.vmem [#allocation4], %s309
        // Predicated region
        $region115: #{_lambda_.5} parent=109 // pred_check
          %p311 = pneg %p85
        $region116: #{_lambda_.5} parent=109 // pred_check_branch
          %313 = sbr.rel (%p311) target = $region118
        $region117: #{_lambda_.5} parent=109 // pred_region
          _
        $region118: #{_lambda_.5} parent=109 // pred_fallthru
          _
        %s314 = sand.u32 %s42, 1
        %s315 = sand.u32 %s42, 1
        %s316 = smul.addr %s315, 8
        %s317 = scalar_lea.vmem [#allocation3], %s316
        %p318 = pneg %p55
        %p319 = pneg %p52
        %s320 = sand.u32 %s72, 1
        %s321 = sand.u32 %s72, 1
        %s322 = smul.addr %s321, 8
        %s323 = scalar_lea.vmem [#allocation4], %s322
        %p324 = pneg %p85
        %p325 = pneg %p82
        %p326 = pneg %p106
        %p327 = pneg %p103
        %p328 = pneg %p127
        %p329 = pneg %p124
        %p330 = pneg %p155
        %p331 = pneg %p152
        %s332 = sand.u32 %s142, 1
        %s333 = scalar_lea.sflag [#allocation6], %s332
        %s334 = sand.u32 %s142, 1
        %s335 = scalar_lea.vmem [#allocation5], %s334
        %s336 = sadd.s32 %s25, 1
        %v338 = vld [vmem:[%s303] sm:$0xf]
        %v339 = vld [vmem:[%s303 + $0x4] sm:$0xf]
        %v340 = vld [vmem:[%s310] sm:$0xf]
        %v341 = vld [vmem:[%s310 + $0x4] sm:$0xf]
        %v344 = vunpack.c.l.b16 %v338
        %v345 = vunpack.c.l.b16 %v339
        %v346 = vpack.c.b16 %v345, %v344
        %v350 = vunpack.c.l.b16 %v340
        %v351 = vunpack.c.l.b16 %v341
        %v352 = vpack.c.b16 %v351, %v350
        %v353 = vld [vmem:[%s2] sm:$0x1]
        %s354 = scalar_lea.vmem %s2, 1
        %v355 = vld [vmem:[%s354] sm:$0x1]
        %356 = vrot.lane.b32.xlu0 %v346, 127
        %v357 = vpop.permute.xlu0 %356
        %358 = vrot.lane.b32.xlu0 %v352, 127
        %v359 = vpop.permute.xlu0 %358
        %vm360 = vcmask 1039360
        %v361 = vsel %vm360, %v357, %v359
        %vm363 = vcmask 130048
        %v365 = vsel %vm363, %v355, 0
        %367 = vmatpush.bf16.msra.mxu0 0
        %368 = vmatpush.bf16.msra.mxu0 0
        %369 = vmatpush.bf16.msra.mxu0 0
        %370 = vmatpush.bf16.msra.mxu0 0
        %371 = vmatpush.bf16.msra.mxu0 0
        %372 = vmatpush.bf16.msra.mxu0 0
        %373 = vmatpush.bf16.msra.mxu0 0
        %374 = vmatpush.bf16.msra.mxu0 %v361
        %375 = vmatmul.bf16.gmra.mxu0 %v365
        %v376 = vpop.f32.mrf.mxu0
        %v377 = vadd.f32 0.0, %v376
        %v378 = vpop.f32.mrf.mxu0
        %379 = vdwg.mxu0
        %v381 = vsel %vm363, %v353, 0
        %383 = vmatpush.bf16.msra.mxu0 0
        %384 = vmatpush.bf16.msra.mxu0 0
        %385 = vmatpush.bf16.msra.mxu0 0
        %386 = vmatpush.bf16.msra.mxu0 0
        %387 = vmatpush.bf16.msra.mxu0 0
        %388 = vmatpush.bf16.msra.mxu0 0
        %389 = vmatpush.bf16.msra.mxu0 0
        %390 = vmatpush.bf16.msra.mxu0 %v346
        %391 = vmatmul.bf16.gmra.mxu0 %v381
        %v392 = vpop.f32.mrf.mxu0
        %v393 = vadd.f32 %v377, %v392
        %v394 = vpop.f32.mrf.mxu0
        %395 = vdwg.mxu0
        %s396 = scalar_lea.vmem %s2, 2
        %v397 = vld [vmem:[%s396] sm:$0x1]
        %398 = vrot.lane.b32.xlu0 %v346, 126
        %v399 = vpop.permute.xlu0 %398
        %400 = vrot.lane.b32.xlu0 %v352, 126
        %v401 = vpop.permute.xlu0 %400
        %vm402 = vcmask 1031168
        %v403 = vsel %vm402, %v399, %v401
        %v406 = vsel %vm363, %v397, 0
        %408 = vmatpush.bf16.msra.mxu0 0
        %409 = vmatpush.bf16.msra.mxu0 0
        %410 = vmatpush.bf16.msra.mxu0 0
        %411 = vmatpush.bf16.msra.mxu0 0
        %412 = vmatpush.bf16.msra.mxu0 0
        %413 = vmatpush.bf16.msra.mxu0 0
        %414 = vmatpush.bf16.msra.mxu0 0
        %415 = vmatpush.bf16.msra.mxu0 %v403
        %416 = vmatmul.bf16.gmra.mxu0 %v406
        %v417 = vpop.f32.mrf.mxu0
        %v418 = vadd.f32 0.0, %v417
        %v419 = vpop.f32.mrf.mxu0
        %420 = vdwg.mxu0
        %v421 = vadd.f32 %v393, %v418
        %v422 = vld [vmem:[#allocation2] sm:$0x1]
        %424 = vset.pattern.permute.xlu0 0
        %425 = vperm.xlu0 %424, %v422
        %v426 = vpop.permute.xlu0 %425
        %v428 = vperm.slane %v426, 0
        %v429 = vadd.f32 %v421, %v428
        %430 = vst [vmem:[%s335] sm:$0x1] %v429
        %s431 = sand.u32 %s142, 1
        %s432 = scalar_lea.sflag [#allocation6], %s431
        %s433 = sand.u32 %s142, 1
        %s434 = scalar_lea.vmem [#allocation5], %s433
        // Predicated region
        $region119: #{_lambda_.5} parent=109 // pred_check
          %p435 = pneg %p152
        $region120: #{_lambda_.5} parent=109 // pred_check_branch
          %437 = sbr.rel (%p435) target = $region122
        $region121: #{_lambda_.5} parent=109 // pred_region
          %439 = vsyncadd %s432, 0
          %s440 = sadd.s32 %s25, %s24
          %s441 = scalar_lea.hbm %s4, %s440
          %s443 = sshll.u32 %s434, 4
          %s444 = int_to_ptr.vmem [resolvable:$true] %s443
          %s445 = sshll.u32 %s441, 4
          %s446 = int_to_ptr.hbm [resolvable:$true] %s445
          %448 = dma.vmem_to_hbm [thread:$0]  %s444, 16, %s446, %s432
        $region122: #{_lambda_.5} parent=109 // pred_fallthru
          _
      $region110: #{_lambda_.5} parent=5 // pred_fallthru
        _
      %p449 = scmp.le.s32.totalorder 2, %s15
      // Predicated region
      $region123: #{_lambda_.5} parent=5 // pred_check
        %p450 = pneg %p449
      $region124: #{_lambda_.5} parent=5 // pred_check_branch
        %452 = sbr.rel (%p450) target = $region126
      $region125: #{_lambda_.5} parent=5 // pred_region
        %s453 = ssub.s32 %s15, 2
        // Predicated region
        $region127: #{_lambda_.5} parent=125 // pred_check
          %p454 = pneg %p158
        $region128: #{_lambda_.5} parent=125 // pred_check_branch
          %456 = sbr.rel (%p454) target = $region130
        $region129: #{_lambda_.5} parent=125 // pred_region
          %s457 = sand.u32 %s143, 1
          %s458 = scalar_lea.sflag [#allocation6], %s457
          %s459 = sand.u32 %s143, 1
          %s460 = scalar_lea.vmem [#allocation5], %s459
          %462 = dma.done %s458, 16
        $region130: #{_lambda_.5} parent=125 // pred_fallthru
          _
      $region126: #{_lambda_.5} parent=5 // pred_fallthru
        _
    $region6: #{_lambda_.5} parent=1 // loop_footer
      %s19 = sadd.s32 1, %s15
    $region7: #{_lambda_.5} parent=1 // loop_footer_branch
      %14 = sbr.rel target = $region3
    $region8: #{_lambda_.5} parent=1 // loop_exit
      _
    %463 = vsyncpa [#allocation6], 1
    %s464 = scalar_lea.sflag [#allocation6], 1
    %465 = vsyncpa %s464, 1

</llo_original>
